<compile_context>
chip_gen: v5e
topology: v5e:2x2
jax: 0.10.0
libtpu: 0.0.40
codegen_flags: <defaults>
</compile_context>

<pallas_src>
import jax
import jax.numpy as jnp
from jax.experimental import pallas as pl
from jax.experimental.pallas import tpu as pltpu

LANE = 128
SUBLANE = 8
BN_EPS = 1e-5


def _round_up(x, m):
    return ((x + m - 1) // m) * m


# -----------------------------------------------------------------------------
# Host-side parameter preparation: fold BN + bias, transpose, pad to 128 lanes.
# -----------------------------------------------------------------------------
def prepare_params(convs, bns):
    """Fold BatchNorm (inference) into the SAGEConv linears, transpose weights
    to [in, out], zero-pad all channel dims to a common 128-lane multiple.

    Returns (params, c_pad) where params is a list of (w_l_t, w_r_t, bias)
    with w_* bf16 [c_pad, c_pad] and bias f32 [1, c_pad]."""
    num_layers = len(convs)
    dims = [convs[0][0].shape[1]] + [c[0].shape[0] for c in convs]
    c_pad = max(_round_up(d, LANE) for d in dims)

    params = []
    for layer in range(num_layers):
        wl, bl, wr = convs[layer]                  # wl, wr: [out, in]; bl: [1, out]
        wl_t = wl.T.astype(jnp.float32)            # [in, out] -- no in-kernel .T
        wr_t = wr.T.astype(jnp.float32)
        b = bl.astype(jnp.float32)
        if layer < num_layers - 1:
            gamma, beta, mean, var = bns[layer]
            s = gamma / jnp.sqrt(var + BN_EPS)     # [1, out]
            wl_t = wl_t * s
            wr_t = wr_t * s
            b = (b - mean) * s + beta
        cin, cout = wl_t.shape
        wl_p = jnp.zeros((c_pad, c_pad), jnp.float32).at[:cin, :cout].set(wl_t)
        wr_p = jnp.zeros((c_pad, c_pad), jnp.float32).at[:cin, :cout].set(wr_t)
        b_p = jnp.zeros((1, c_pad), jnp.float32).at[:, :cout].set(b)
        params.append((wl_p.astype(jnp.bfloat16), wr_p.astype(jnp.bfloat16), b_p))
    return params, c_pad


def pad_graph(adj_norm, x, n_pad, c_pad):
    """Zero-pad the row-normalized adjacency and features; cast to bf16
    (halves HBM/VMEM traffic for the N^2 adjacency stream)."""
    n, c = x.shape
    adj_p = jnp.zeros((n_pad, n_pad), jnp.float32).at[:n, :n].set(adj_norm)
    x_p = jnp.zeros((n_pad, c_pad), jnp.float32).at[:n, :c].set(x)
    return adj_p.astype(jnp.bfloat16), x_p.astype(jnp.bfloat16)


# -----------------------------------------------------------------------------
# Kernel 1: fully fused multi-layer kernel (small graphs, adjacency resident).
# -----------------------------------------------------------------------------
def _make_fused_kernel(num_layers, out_valid):
    def kernel(*refs):
        adj_ref, x_ref = refs[0], refs[1]
        param_refs = refs[2:2 + 3 * num_layers]
        o_ref = refs[2 + 3 * num_layers]
        h_ref = refs[3 + 3 * num_layers]            # bf16 VMEM scratch [N_pad, C_pad]

        adj = adj_ref[...]                          # bf16, loaded into VMEM once
        h_ref[...] = x_ref[...]

        for layer in range(num_layers):
            wl = param_refs[3 * layer][...]         # bf16 [C_pad, C_pad] (BN folded)
            wr = param_refs[3 * layer + 1][...]
            b = param_refs[3 * layer + 2][...]      # f32  [1, C_pad]
            xc = h_ref[...]                         # bf16 activations of prev layer

            # mean aggregation + SAGEConv linear (bf16 MXU, f32 accumulate)
            agg = jnp.dot(adj, xc, preferred_element_type=jnp.float32)
            h = (jnp.dot(agg.astype(jnp.bfloat16), wl,
                         preferred_element_type=jnp.float32)
                 + jnp.dot(xc, wr, preferred_element_type=jnp.float32)
                 + b)

            if layer < num_layers - 1:
                # BN already folded into wl/wr/b; ReLU only.
                # TODO(synk): dropout is identity in eval mode; training-mode
                # dropout would use pltpu.prng_seed / prng_random_bits here.
                h_ref[...] = jnp.maximum(h, 0.0).astype(h_ref.dtype)
            else:
                # masked log_softmax over the valid (unpadded) output columns
                col = jax.lax.broadcasted_iota(jnp.int32, h.shape, 1)
                hm = jnp.where(col < out_valid, h, -1e30)
                m = jnp.max(hm, axis=-1, keepdims=True)
                z = hm - m
                lse = jnp.log(jnp.sum(jnp.exp(z), axis=-1, keepdims=True))
                o_ref[...] = z - lse
    return kernel


def sage_forward_fused(adj_p, x_p, params, out_channels):
    """All layers in ONE pallas_call: adjacency DMA'd once, intermediates in
    VMEM scratch.  Use only when the padded graph comfortably fits VMEM."""
    n_pad, c_pad = x_p.shape
    num_layers = len(params)
    flat = [adj_p, x_p]
    for wl, wr, b in params:
        flat += [wl, wr, b]

    kernel = _make_fused_kernel(num_layers, out_channels)
    return pl.pallas_call(
        kernel,
        out_shape=jax.ShapeDtypeStruct((n_pad, c_pad), jnp.float32),
        in_specs=[pl.BlockSpec(memory_space=pltpu.VMEM) for _ in flat],
        out_specs=pl.BlockSpec(memory_space=pltpu.VMEM),
        scratch_shapes=[pltpu.VMEM((n_pad, c_pad), jnp.bfloat16)],
    )(*flat)


# -----------------------------------------------------------------------------
# Kernel 2: tiled / pipelined per-layer kernel (scalable in N).
# -----------------------------------------------------------------------------
def _make_layer_kernel(is_last, out_valid):
    def kernel(adj_ref, xk_ref, xi_ref, wl_ref, wr_ref, b_ref, o_ref, agg_ref):
        k = pl.program_id(1)

        @pl.when(k == 0)
        def _init():
            agg_ref[...] = jnp.zeros_like(agg_ref)

        # streamed mean aggregation: accumulate A_norm[i, k] @ x[k] in f32
        agg_ref[...] += jnp.dot(adj_ref[...], xk_ref[...],
                                preferred_element_type=jnp.float32)

        @pl.when(k == pl.num_programs(1) - 1)
        def _finalize():
            # weight matmuls + root term hoisted out of the K reduction
            h = (jnp.dot(agg_ref[...].astype(jnp.bfloat16), wl_ref[...],
                         preferred_element_type=jnp.float32)
                 + jnp.dot(xi_ref[...], wr_ref[...],
                           preferred_element_type=jnp.float32)
                 + b_ref[...])
            if is_last:
                col = jax.lax.broadcasted_iota(jnp.int32, h.shape, 1)
                hm = jnp.where(col < out_valid, h, -1e30)
                m = jnp.max(hm, axis=-1, keepdims=True)
                z = hm - m
                lse = jnp.log(jnp.sum(jnp.exp(z), axis=-1, keepdims=True))
                o_ref[...] = (z - lse).astype(o_ref.dtype)
            else:
                # BN folded into weights; ReLU only.
                # TODO(synk): dropout is identity in eval mode.
                o_ref[...] = jnp.maximum(h, 0.0).astype(o_ref.dtype)
    return kernel


def sage_layer_tiled(adj_p, x_p, wl, wr, b, *, is_last, out_channels,
                     tile_m=256, tile_k=256):
    """One SAGE layer, tiled over (row tiles, K tiles) of the adjacency.
    tile defaults (256x256 bf16 adj tile = 128 KiB) fit the scoped-VMEM budget
    of v5e/v6e/v7x; on v5e/v6e (128 MiB VMEM) 512-1024 row tiles get closer to
    the HBM roofline."""
    n_pad = adj_p.shape[0]
    c_pad = x_p.shape[1]
    tm = min(tile_m, n_pad)
    tk = min(tile_k, n_pad)
    assert n_pad % tm == 0 and n_pad % tk == 0, "pad N to a tile multiple"
    grid = (n_pad // tm, n_pad // tk)
    out_dtype = jnp.float32 if is_last else jnp.bfloat16

    kernel = _make_layer_kernel(is_last, out_channels)
    return pl.pallas_call(
        kernel,
        out_shape=jax.ShapeDtypeStruct((n_pad, c_pad), out_dtype),
        grid_spec=pltpu.PrefetchScalarGridSpec(
            num_scalar_prefetch=0,
            grid=grid,
            in_specs=[
                pl.BlockSpec((tm, tk), lambda i, k: (i, k)),        # adjacency tile
                pl.BlockSpec((tk, c_pad), lambda i, k: (k, 0)),     # x rows for aggregation
                pl.BlockSpec((tm, c_pad), lambda i, k: (i, 0)),     # x rows for root term
                pl.BlockSpec((c_pad, c_pad), lambda i, k: (0, 0)),  # w_l (folded, [in,out])
                pl.BlockSpec((c_pad, c_pad), lambda i, k: (0, 0)),  # w_r
                pl.BlockSpec((1, c_pad), lambda i, k: (0, 0)),      # bias
            ],
            out_specs=pl.BlockSpec((tm, c_pad), lambda i, k: (i, 0)),
            scratch_shapes=[pltpu.VMEM((tm, c_pad), jnp.float32)],
        ),
        compiler_params=pltpu.CompilerParams(
            dimension_semantics=("parallel", "arbitrary")),
    )(adj_p, x_p, x_p, wl, wr, b)


def sage_forward_tiled(adj_p, x_p, params, out_channels, *, tile_n=256):
    num_layers = len(params)
    h = x_p
    for layer, (wl, wr, b) in enumerate(params):
        h = sage_layer_tiled(adj_p, h, wl, wr, b,
                             is_last=(layer == num_layers - 1),
                             out_channels=out_channels,
                             tile_m=tile_n, tile_k=tile_n)
    return h


# -----------------------------------------------------------------------------
# Pure-JAX reference (same padded / bf16-quantized tensors as the kernels).
# -----------------------------------------------------------------------------
def sage_reference(adj_p, x_p, params, out_channels):
    num_layers = len(params)
    h = x_p
    for layer, (wl, wr, b) in enumerate(params):
        agg = jnp.dot(adj_p, h, preferred_element_type=jnp.float32)
        z = (jnp.dot(agg.astype(jnp.bfloat16), wl, preferred_element_type=jnp.float32)
             + jnp.dot(h, wr, preferred_element_type=jnp.float32)
             + b)
        if layer < num_layers - 1:
            h = jnp.maximum(z, 0.0).astype(jnp.bfloat16)
        else:
            return jax.nn.log_softmax(z[:, :out_channels], axis=-1)


# -----------------------------------------------------------------------------
# Parameter init (deterministic, synthetic, torch-style layouts).
# -----------------------------------------------------------------------------
def init_sage_params(key, in_channels, hidden_channels, out_channels, num_layers):
    dims = [in_channels] + [hidden_channels] * (num_layers - 1) + [out_channels]
    convs, bns = [], []
    for layer in range(num_layers):
        fan_in, fan_out = dims[layer], dims[layer + 1]
        key, k_wl, k_bl, k_wr = jax.random.split(key, 4)
        scale = 1.0 / jnp.sqrt(jnp.float32(fan_in))
        wl = jax.random.normal(k_wl, (fan_out, fan_in), jnp.float32) * scale
        bl = jax.random.normal(k_bl, (1, fan_out), jnp.float32) * 0.1
        wr = jax.random.normal(k_wr, (fan_out, fan_in), jnp.float32) * scale
        convs.append((wl, bl, wr))
        if layer < num_layers - 1:
            key, k_g, k_b, k_m, k_v = jax.random.split(key, 5)
            gamma = 1.0 + 0.1 * jax.random.normal(k_g, (1, fan_out), jnp.float32)
            beta = 0.1 * jax.random.normal(k_b, (1, fan_out), jnp.float32)
            mean = 0.1 * jax.random.normal(k_m, (1, fan_out), jnp.float32)
            var = jnp.abs(jax.random.normal(k_v, (1, fan_out), jnp.float32)) + 0.5
            bns.append((gamma, beta, mean, var))
    return convs, bns


# -----------------------------------------------------------------------------
if __name__ == "__main__":
    IN_C, HID_C, OUT_C = 16, 32, 8
    NUM_LAYERS = 3
    DROPOUT = 0.5   # unused at inference: F.dropout(training=False) is identity

    key = jax.random.PRNGKey(0)
    key, k_params = jax.random.split(key)
    convs, bns = init_sage_params(k_params, IN_C, HID_C, OUT_C, NUM_LAYERS)
    params, c_pad = prepare_params(convs, bns)      # BN folded, transposed, padded

    def make_graph(k, n):
        k_x, k_adj = jax.random.split(k)
        x = jax.random.normal(k_x, (n, IN_C), jnp.float32)
        adj = (jax.random.uniform(k_adj, (n, n)) < 0.05).astype(jnp.float32)
        deg = jnp.maximum(jnp.sum(adj, axis=1, keepdims=True), 1.0)
        return x, adj / deg

    def check(out, ref, n):
        assert out.shape == (n, OUT_C)
        assert bool(jnp.all(jnp.isfinite(out)))
        # rows of log_softmax must exp-sum to 1
        assert bool(jnp.allclose(jnp.sum(jnp.exp(out), axis=-1), 1.0, atol=1e-3))
        assert bool(jnp.allclose(out, ref, atol=5e-3, rtol=5e-3))

    # --- small graph: fully fused single-pallas_call path --------------------
    key, k1 = jax.random.split(key)
    N1 = 128
    x1, adj1 = make_graph(k1, N1)
    adj_p1, x_p1 = pad_graph(adj1, x1, _round_up(N1, SUBLANE), c_pad)
    out1 = sage_forward_fused(adj_p1, x_p1, params, OUT_C)
    out1 = jax.block_until_ready(out1)[:N1, :OUT_C]
    ref1 = sage_reference(adj_p1, x_p1, params, OUT_C)[:N1]
    check(out1, ref1, N1)

    # --- larger graph: tiled / pipelined per-layer path (grid = 2 x 2) -------
    key, k2 = jax.random.split(key)
    N2, TILE = 256, 128
    x2, adj2 = make_graph(k2, N2)
    adj_p2, x_p2 = pad_graph(adj2, x2, _round_up(N2, TILE), c_pad)
    out2 = sage_forward_tiled(adj_p2, x_p2, params, OUT_C, tile_n=TILE)
    out2 = jax.block_until_ready(out2)[:N2, :OUT_C]
    ref2 = sage_reference(adj_p2, x_p2, params, OUT_C)[:N2]
    check(out2, ref2, N2)

    print("KERNEL_OK")
</pallas_src>

<mosaic_0001>
module attributes {stable_mosaic.version = 11 : i64} {
  func.func @kernel(%arg0: memref<128x128xbf16, #tpu.memory_space<vmem>>, %arg1: memref<128x128xbf16, #tpu.memory_space<vmem>>, %arg2: memref<128x128xbf16, #tpu.memory_space<vmem>>, %arg3: memref<128x128xbf16, #tpu.memory_space<vmem>>, %arg4: memref<1x128xf32, #tpu.memory_space<vmem>>, %arg5: memref<128x128xbf16, #tpu.memory_space<vmem>>, %arg6: memref<128x128xbf16, #tpu.memory_space<vmem>>, %arg7: memref<1x128xf32, #tpu.memory_space<vmem>>, %arg8: memref<128x128xbf16, #tpu.memory_space<vmem>>, %arg9: memref<128x128xbf16, #tpu.memory_space<vmem>>, %arg10: memref<1x128xf32, #tpu.memory_space<vmem>>, %arg11: memref<128x128xf32, #tpu.memory_space<vmem>>, %arg12: memref<128x128xbf16, #tpu.memory_space<vmem>>) attributes {dimension_semantics = [], scalar_prefetch = 0 : i64, scratch_operands = 1 : i64, tpu.core_type = #tpu.core_type<tc>} {
    %c0 = arith.constant 0 : index
    %c0_0 = arith.constant 0 : index
    %0 = vector.load %arg0[%c0, %c0_0] : memref<128x128xbf16, #tpu.memory_space<vmem>>, vector<128x128xbf16>
    %c0_1 = arith.constant 0 : index
    %c0_2 = arith.constant 0 : index
    %1 = vector.load %arg1[%c0_1, %c0_2] : memref<128x128xbf16, #tpu.memory_space<vmem>>, vector<128x128xbf16>
    %c0_3 = arith.constant 0 : index
    %c0_4 = arith.constant 0 : index
    %2 = vector.load %arg12[%c0_3, %c0_4] : memref<128x128xbf16, #tpu.memory_space<vmem>>, vector<128x128xbf16>
    tpu.vector_store %arg12[%c0_3, %c0_4], %1 {strides = array<i32>} : memref<128x128xbf16, #tpu.memory_space<vmem>>, vector<128x128xbf16>,
    %c0_5 = arith.constant 0 : index
    %c0_6 = arith.constant 0 : index
    %3 = vector.load %arg2[%c0_5, %c0_6] : memref<128x128xbf16, #tpu.memory_space<vmem>>, vector<128x128xbf16>
    %c0_7 = arith.constant 0 : index
    %c0_8 = arith.constant 0 : index
    %4 = vector.load %arg3[%c0_7, %c0_8] : memref<128x128xbf16, #tpu.memory_space<vmem>>, vector<128x128xbf16>
    %c0_9 = arith.constant 0 : index
    %c0_10 = arith.constant 0 : index
    %5 = vector.load %arg4[%c0_9, %c0_10] : memref<1x128xf32, #tpu.memory_space<vmem>>, vector<1x128xf32>
    %c0_11 = arith.constant 0 : index
    %c0_12 = arith.constant 0 : index
    %6 = vector.load %arg12[%c0_11, %c0_12] : memref<128x128xbf16, #tpu.memory_space<vmem>>, vector<128x128xbf16>
    %cst = arith.constant dense<0.000000e+00> : vector<128x128xf32>
    %7 = tpu.matmul %0, %6, %cst {dimension_numbers = #tpu.dot_dimension_numbers<[1], [0], [0], [1], [0, 0, 1, 1], [], []>} : vector<128x128xbf16>, vector<128x128xbf16>, vector<128x128xf32> -> vector<128x128xf32>
    %8 = arith.truncf %7 : vector<128x128xf32> to vector<128x128xbf16>
    %cst_13 = arith.constant dense<0.000000e+00> : vector<128x128xf32>
    %9 = tpu.matmul %8, %3, %cst_13 {dimension_numbers = #tpu.dot_dimension_numbers<[1], [0], [0], [1], [0, 0, 1, 1], [], []>} : vector<128x128xbf16>, vector<128x128xbf16>, vector<128x128xf32> -> vector<128x128xf32>
    %cst_14 = arith.constant dense<0.000000e+00> : vector<128x128xf32>
    %10 = tpu.matmul %6, %4, %cst_14 {dimension_numbers = #tpu.dot_dimension_numbers<[1], [0], [0], [1], [0, 0, 1, 1], [], []>} : vector<128x128xbf16>, vector<128x128xbf16>, vector<128x128xf32> -> vector<128x128xf32>
    %11 = arith.addf %9, %10 : vector<128x128xf32>
    %12 = vector.broadcast %5 : vector<1x128xf32> to vector<128x128xf32>
    %13 = arith.addf %11, %12 : vector<128x128xf32>
    %cst_15 = arith.constant 0.000000e+00 : f32
    %14 = vector.broadcast %cst_15 : f32 to vector<128x128xf32>
    %15 = arith.maximumf %13, %14 : vector<128x128xf32>
    %16 = arith.truncf %15 : vector<128x128xf32> to vector<128x128xbf16>
    %c0_16 = arith.constant 0 : index
    %c0_17 = arith.constant 0 : index
    %17 = vector.load %arg12[%c0_16, %c0_17] : memref<128x128xbf16, #tpu.memory_space<vmem>>, vector<128x128xbf16>
    tpu.vector_store %arg12[%c0_16, %c0_17], %16 {strides = array<i32>} : memref<128x128xbf16, #tpu.memory_space<vmem>>, vector<128x128xbf16>,
    %c0_18 = arith.constant 0 : index
    %c0_19 = arith.constant 0 : index
    %18 = vector.load %arg5[%c0_18, %c0_19] : memref<128x128xbf16, #tpu.memory_space<vmem>>, vector<128x128xbf16>
    %c0_20 = arith.constant 0 : index
    %c0_21 = arith.constant 0 : index
    %19 = vector.load %arg6[%c0_20, %c0_21] : memref<128x128xbf16, #tpu.memory_space<vmem>>, vector<128x128xbf16>
    %c0_22 = arith.constant 0 : index
    %c0_23 = arith.constant 0 : index
    %20 = vector.load %arg7[%c0_22, %c0_23] : memref<1x128xf32, #tpu.memory_space<vmem>>, vector<1x128xf32>
    %c0_24 = arith.constant 0 : index
    %c0_25 = arith.constant 0 : index
    %21 = vector.load %arg12[%c0_24, %c0_25] : memref<128x128xbf16, #tpu.memory_space<vmem>>, vector<128x128xbf16>
    %cst_26 = arith.constant dense<0.000000e+00> : vector<128x128xf32>
    %22 = tpu.matmul %0, %21, %cst_26 {dimension_numbers = #tpu.dot_dimension_numbers<[1], [0], [0], [1], [0, 0, 1, 1], [], []>} : vector<128x128xbf16>, vector<128x128xbf16>, vector<128x128xf32> -> vector<128x128xf32>
    %23 = arith.truncf %22 : vector<128x128xf32> to vector<128x128xbf16>
    %cst_27 = arith.constant dense<0.000000e+00> : vector<128x128xf32>
    %24 = tpu.matmul %23, %18, %cst_27 {dimension_numbers = #tpu.dot_dimension_numbers<[1], [0], [0], [1], [0, 0, 1, 1], [], []>} : vector<128x128xbf16>, vector<128x128xbf16>, vector<128x128xf32> -> vector<128x128xf32>
    %cst_28 = arith.constant dense<0.000000e+00> : vector<128x128xf32>
    %25 = tpu.matmul %21, %19, %cst_28 {dimension_numbers = #tpu.dot_dimension_numbers<[1], [0], [0], [1], [0, 0, 1, 1], [], []>} : vector<128x128xbf16>, vector<128x128xbf16>, vector<128x128xf32> -> vector<128x128xf32>
    %26 = arith.addf %24, %25 : vector<128x128xf32>
    %27 = vector.broadcast %20 : vector<1x128xf32> to vector<128x128xf32>
    %28 = arith.addf %26, %27 : vector<128x128xf32>
    %cst_29 = arith.constant 0.000000e+00 : f32
    %29 = vector.broadcast %cst_29 : f32 to vector<128x128xf32>
    %30 = arith.maximumf %28, %29 : vector<128x128xf32>
    %31 = arith.truncf %30 : vector<128x128xf32> to vector<128x128xbf16>
    %c0_30 = arith.constant 0 : index
    %c0_31 = arith.constant 0 : index
    %32 = vector.load %arg12[%c0_30, %c0_31] : memref<128x128xbf16, #tpu.memory_space<vmem>>, vector<128x128xbf16>
    tpu.vector_store %arg12[%c0_30, %c0_31], %31 {strides = array<i32>} : memref<128x128xbf16, #tpu.memory_space<vmem>>, vector<128x128xbf16>,
    %c0_32 = arith.constant 0 : index
    %c0_33 = arith.constant 0 : index
    %33 = vector.load %arg8[%c0_32, %c0_33] : memref<128x128xbf16, #tpu.memory_space<vmem>>, vector<128x128xbf16>
    %c0_34 = arith.constant 0 : index
    %c0_35 = arith.constant 0 : index
    %34 = vector.load %arg9[%c0_34, %c0_35] : memref<128x128xbf16, #tpu.memory_space<vmem>>, vector<128x128xbf16>
    %c0_36 = arith.constant 0 : index
    %c0_37 = arith.constant 0 : index
    %35 = vector.load %arg10[%c0_36, %c0_37] : memref<1x128xf32, #tpu.memory_space<vmem>>, vector<1x128xf32>
    %c0_38 = arith.constant 0 : index
    %c0_39 = arith.constant 0 : index
    %36 = vector.load %arg12[%c0_38, %c0_39] : memref<128x128xbf16, #tpu.memory_space<vmem>>, vector<128x128xbf16>
    %cst_40 = arith.constant dense<0.000000e+00> : vector<128x128xf32>
    %37 = tpu.matmul %0, %36, %cst_40 {dimension_numbers = #tpu.dot_dimension_numbers<[1], [0], [0], [1], [0, 0, 1, 1], [], []>} : vector<128x128xbf16>, vector<128x128xbf16>, vector<128x128xf32> -> vector<128x128xf32>
    %38 = arith.truncf %37 : vector<128x128xf32> to vector<128x128xbf16>
    %cst_41 = arith.constant dense<0.000000e+00> : vector<128x128xf32>
    %39 = tpu.matmul %38, %33, %cst_41 {dimension_numbers = #tpu.dot_dimension_numbers<[1], [0], [0], [1], [0, 0, 1, 1], [], []>} : vector<128x128xbf16>, vector<128x128xbf16>, vector<128x128xf32> -> vector<128x128xf32>
    %cst_42 = arith.constant dense<0.000000e+00> : vector<128x128xf32>
    %40 = tpu.matmul %36, %34, %cst_42 {dimension_numbers = #tpu.dot_dimension_numbers<[1], [0], [0], [1], [0, 0, 1, 1], [], []>} : vector<128x128xbf16>, vector<128x128xbf16>, vector<128x128xf32> -> vector<128x128xf32>
    %41 = arith.addf %39, %40 : vector<128x128xf32>
    %42 = vector.broadcast %35 : vector<1x128xf32> to vector<128x128xf32>
    %43 = arith.addf %41, %42 : vector<128x128xf32>
    %44 = tpu.iota {dimensions = array<i32: 1>} : vector<128x128xi32>
    %c8_i32 = arith.constant 8 : i32
    %45 = vector.broadcast %c8_i32 : i32 to vector<128x128xi32>
    %46 = arith.cmpi slt, %44, %45 : vector<128x128xi32>
    %cst_43 = arith.constant -1.000000e+30 : f32
    %47 = vector.broadcast %cst_43 : f32 to vector<128x128xf32>
    %48 = arith.select %46, %43, %47 : vector<128x128xi1>, vector<128x128xf32>
    %cst_44 = arith.constant dense<0xFF800000> : vector<128xf32>
    %49 = vector.multi_reduction <maximumf>, %48, %cst_44 [1] : vector<128x128xf32> to vector<128xf32>
    %50 = vector.shape_cast %49 : vector<128xf32> to vector<128x1xf32>
    %51 = vector.broadcast %50 : vector<128x1xf32> to vector<128x128xf32>
    %52 = arith.subf %48, %51 : vector<128x128xf32>
    %53 = math.exp %52 : vector<128x128xf32>
    %cst_45 = arith.constant dense<0.000000e+00> : vector<128xf32>
    %54 = vector.multi_reduction <add>, %53, %cst_45 [1] : vector<128x128xf32> to vector<128xf32>
    %55 = vector.shape_cast %54 : vector<128xf32> to vector<128x1xf32>
    %56 = math.log %55 : vector<128x1xf32>
    %57 = vector.broadcast %56 : vector<128x1xf32> to vector<128x128xf32>
    %58 = arith.subf %52, %57 : vector<128x128xf32>
    %c0_46 = arith.constant 0 : index
    %c0_47 = arith.constant 0 : index
    %59 = vector.load %arg11[%c0_46, %c0_47] : memref<128x128xf32, #tpu.memory_space<vmem>>, vector<128x128xf32>
    tpu.vector_store %arg11[%c0_46, %c0_47], %58 {strides = array<i32>} : memref<128x128xf32, #tpu.memory_space<vmem>>, vector<128x128xf32>,
    return
  }
}

</mosaic_0001>

<llo_original>
// kernel: tpu_custom_call.1
$region0: #{tpu_custom_call.1}
  #allocation0 [shape = 'u32[]', space=smem, size = 0x4, offset = 0x4, fixed_abs, tag = 'smem constant byte address 0x4 - core index']
  #allocation1 [shape = 'u32[72,128]{1,0:T(1,128)}', space=vmem, size = 0x9000, scoped, tag = 'internal scratch']
  #allocation2 [shape = 'bf16[128,128]{1,0:T(8,128)(2,1)}', space=vmem, size = 0x8000, scoped, tag = 'scratch operand']
  %s0 = inlined_call_operand.hbm [shape: bf16[128,128], index: 0, kind: input, shape index: {}]
  %s1 = inlined_call_operand.hbm [shape: bf16[128,128], index: 1, kind: input, shape index: {}]
  %s2 = inlined_call_operand.hbm [shape: bf16[128,128], index: 2, kind: input, shape index: {}]
  %s3 = inlined_call_operand.hbm [shape: bf16[128,128], index: 3, kind: input, shape index: {}]
  %s4 = inlined_call_operand.vmem [shape: f32[1,128], index: 4, kind: input, shape index: {}]
  %s5 = inlined_call_operand.hbm [shape: bf16[128,128], index: 5, kind: input, shape index: {}]
  %s6 = inlined_call_operand.hbm [shape: bf16[128,128], index: 6, kind: input, shape index: {}]
  %s7 = inlined_call_operand.vmem [shape: f32[1,128], index: 7, kind: input, shape index: {}]
  %s8 = inlined_call_operand.hbm [shape: bf16[128,128], index: 8, kind: input, shape index: {}]
  %s9 = inlined_call_operand.hbm [shape: bf16[128,128], index: 9, kind: input, shape index: {}]
  %s10 = inlined_call_operand.vmem [shape: f32[1,128], index: 10, kind: input, shape index: {}]
  %s11 = inlined_call_operand.hbm [shape: f32[128,128], index: 11, kind: output, shape index: {}]
  %s12 = sld [smem:[#allocation0]]
  $region86: #{tpu_custom_call.1} parent=0
    _
  %s14 = ssub.s32 1, %s12
  %s15 = scalar_select 0, %s14, %s12
  $region1: #{tpu_custom_call.1} parent=0
    #allocation3 [shape = 'u8[32768]{0}', space=vmem, size = 0x8000, scoped, tag = 'input window, operand 0, single buffered']
    #allocation4 [shape = 's32[1]{0}', space=sflag, size = 0x4, scoped, tag = 'scoped memory for tpu_custom_call.1']
    #allocation5 [shape = 's32[1]{0}', space=sflag, size = 0x4, scoped, tag = 'scoped memory for tpu_custom_call.1']
    #allocation6 [shape = 'u8[32768]{0}', space=vmem, size = 0x8000, scoped, tag = 'input window, operand 1, single buffered']
    #allocation7 [shape = 's32[1]{0}', space=sflag, size = 0x4, scoped, tag = 'scoped memory for tpu_custom_call.1']
    #allocation8 [shape = 'u8[32768]{0}', space=vmem, size = 0x8000, scoped, tag = 'input window, operand 2, single buffered']
    #allocation9 [shape = 'u8[32768]{0}', space=vmem, size = 0x8000, scoped, tag = 'input window, operand 3, single buffered']
    #allocation10 [shape = 's32[1]{0}', space=sflag, size = 0x4, scoped, tag = 'scoped memory for tpu_custom_call.1']
    #allocation11 [shape = 'u8[32768]{0}', space=vmem, size = 0x8000, scoped, tag = 'input window, operand 5, single buffered']
    #allocation12 [shape = 'u8[32768]{0}', space=vmem, size = 0x8000, scoped, tag = 'input window, operand 6, single buffered']
    #allocation13 [shape = 's32[1]{0}', space=sflag, size = 0x4, scoped, tag = 'scoped memory for tpu_custom_call.1']
    #allocation14 [shape = 'u8[32768]{0}', space=vmem, size = 0x8000, scoped, tag = 'input window, operand 8, single buffered']
    #allocation15 [shape = 'u8[32768]{0}', space=vmem, size = 0x8000, scoped, tag = 'input window, operand 9, single buffered']
    #allocation16 [shape = 's32[1]{0}', space=sflag, size = 0x4, scoped, tag = 'scoped memory for tpu_custom_call.1']
    #allocation17 [shape = 'u8[65536]{0}', space=vmem, size = 0x10000, scoped, tag = 'output window, operand 0, single buffered']
    %16 = vsyncpa [#allocation4], 0
    %17 = vsyncpa [#allocation7], 0
    %18 = vsyncpa [#allocation10], 0
    %19 = vsyncpa [#allocation13], 0
    %20 = vsyncpa [#allocation16], 0
    %21 = vsyncpa [#allocation5], 0
    // Predicated region
    $region2: #{tpu_custom_call.1} parent=1 // pred_check
      _
    $region3: #{tpu_custom_call.1} parent=1 // pred_check_branch
      %23 = sbr.rel (0) target = $region5
    $region4: #{tpu_custom_call.1} parent=1 // pred_region
      %25 = vsyncadd [#allocation4], 0
      %s26 = sshll.u32 %s0, 4
      %s27 = int_to_ptr.hbm [resolvable:$true] %s26
      %s28 = sshll.u32 [#allocation3], 4
      %s29 = int_to_ptr.vmem [resolvable:$true] %s28
      %34 = dma.hbm_to_vmem [thread:$0]  %s27, 1024, %s29, [#allocation4], 64, 64, 4
    $region5: #{tpu_custom_call.1} parent=1 // pred_fallthru
      _
    // Predicated region
    $region6: #{tpu_custom_call.1} parent=1 // pred_check
      _
    $region7: #{tpu_custom_call.1} parent=1 // pred_check_branch
      %36 = sbr.rel (0) target = $region9
    $region8: #{tpu_custom_call.1} parent=1 // pred_region
      %38 = vsyncadd [#allocation7], 0
      %s39 = sshll.u32 %s1, 4
      %s40 = int_to_ptr.hbm [resolvable:$true] %s39
      %s41 = sshll.u32 [#allocation6], 4
      %s42 = int_to_ptr.vmem [resolvable:$true] %s41
      %47 = dma.hbm_to_vmem [thread:$0]  %s40, 1024, %s42, [#allocation7], 64, 64, 4
    $region9: #{tpu_custom_call.1} parent=1 // pred_fallthru
      _
    // Predicated region
    $region10: #{tpu_custom_call.1} parent=1 // pred_check
      _
    $region11: #{tpu_custom_call.1} parent=1 // pred_check_branch
      %49 = sbr.rel (0) target = $region13
    $region12: #{tpu_custom_call.1} parent=1 // pred_region
      %51 = vsyncadd [#allocation7], 0
      %s52 = sshll.u32 %s2, 4
      %s53 = int_to_ptr.hbm [resolvable:$true] %s52
      %s54 = sshll.u32 [#allocation8], 4
      %s55 = int_to_ptr.vmem [resolvable:$true] %s54
      %60 = dma.hbm_to_vmem [thread:$0]  %s53, 1024, %s55, [#allocation7], 64, 64, 4
    $region13: #{tpu_custom_call.1} parent=1 // pred_fallthru
      _
    // Predicated region
    $region14: #{tpu_custom_call.1} parent=1 // pred_check
      _
    $region15: #{tpu_custom_call.1} parent=1 // pred_check_branch
      %62 = sbr.rel (0) target = $region17
    $region16: #{tpu_custom_call.1} parent=1 // pred_region
      %64 = vsyncadd [#allocation10], 0
      %s65 = sshll.u32 %s3, 4
      %s66 = int_to_ptr.hbm [resolvable:$true] %s65
      %s67 = sshll.u32 [#allocation9], 4
      %s68 = int_to_ptr.vmem [resolvable:$true] %s67
      %73 = dma.hbm_to_vmem [thread:$0]  %s66, 1024, %s68, [#allocation10], 64, 64, 4
    $region17: #{tpu_custom_call.1} parent=1 // pred_fallthru
      _
    // Predicated region
    $region18: #{tpu_custom_call.1} parent=1 // pred_check
      _
    $region19: #{tpu_custom_call.1} parent=1 // pred_check_branch
      %75 = sbr.rel (0) target = $region21
    $region20: #{tpu_custom_call.1} parent=1 // pred_region
      _
    $region21: #{tpu_custom_call.1} parent=1 // pred_fallthru
      _
    // Predicated region
    $region22: #{tpu_custom_call.1} parent=1 // pred_check
      _
    $region23: #{tpu_custom_call.1} parent=1 // pred_check_branch
      %77 = sbr.rel (0) target = $region25
    $region24: #{tpu_custom_call.1} parent=1 // pred_region
      %79 = vsyncadd [#allocation10], 0
      %s80 = sshll.u32 %s5, 4
      %s81 = int_to_ptr.hbm [resolvable:$true] %s80
      %s82 = sshll.u32 [#allocation11], 4
      %s83 = int_to_ptr.vmem [resolvable:$true] %s82
      %88 = dma.hbm_to_vmem [thread:$0]  %s81, 1024, %s83, [#allocation10], 64, 64, 4
    $region25: #{tpu_custom_call.1} parent=1 // pred_fallthru
      _
    // Predicated region
    $region26: #{tpu_custom_call.1} parent=1 // pred_check
      _
    $region27: #{tpu_custom_call.1} parent=1 // pred_check_branch
      %90 = sbr.rel (0) target = $region29
    $region28: #{tpu_custom_call.1} parent=1 // pred_region
      %92 = vsyncadd [#allocation13], 0
      %s93 = sshll.u32 %s6, 4
      %s94 = int_to_ptr.hbm [resolvable:$true] %s93
      %s95 = sshll.u32 [#allocation12], 4
      %s96 = int_to_ptr.vmem [resolvable:$true] %s95
      %101 = dma.hbm_to_vmem [thread:$0]  %s94, 1024, %s96, [#allocation13], 64, 64, 4
    $region29: #{tpu_custom_call.1} parent=1 // pred_fallthru
      _
    // Predicated region
    $region30: #{tpu_custom_call.1} parent=1 // pred_check
      _
    $region31: #{tpu_custom_call.1} parent=1 // pred_check_branch
      %103 = sbr.rel (0) target = $region33
    $region32: #{tpu_custom_call.1} parent=1 // pred_region
      _
    $region33: #{tpu_custom_call.1} parent=1 // pred_fallthru
      _
    // Predicated region
    $region34: #{tpu_custom_call.1} parent=1 // pred_check
      _
    $region35: #{tpu_custom_call.1} parent=1 // pred_check_branch
      %105 = sbr.rel (0) target = $region37
    $region36: #{tpu_custom_call.1} parent=1 // pred_region
      %107 = vsyncadd [#allocation13], 0
      %s108 = sshll.u32 %s8, 4
      %s109 = int_to_ptr.hbm [resolvable:$true] %s108
      %s110 = sshll.u32 [#allocation14], 4
      %s111 = int_to_ptr.vmem [resolvable:$true] %s110
      %116 = dma.hbm_to_vmem [thread:$0]  %s109, 1024, %s111, [#allocation13], 64, 64, 4
    $region37: #{tpu_custom_call.1} parent=1 // pred_fallthru
      _
    // Predicated region
    $region38: #{tpu_custom_call.1} parent=1 // pred_check
      _
    $region39: #{tpu_custom_call.1} parent=1 // pred_check_branch
      %118 = sbr.rel (0) target = $region41
    $region40: #{tpu_custom_call.1} parent=1 // pred_region
      %120 = vsyncadd [#allocation16], 0
      %s121 = sshll.u32 %s9, 4
      %s122 = int_to_ptr.hbm [resolvable:$true] %s121
      %s123 = sshll.u32 [#allocation15], 4
      %s124 = int_to_ptr.vmem [resolvable:$true] %s123
      %129 = dma.hbm_to_vmem [thread:$0]  %s122, 1024, %s124, [#allocation16], 64, 64, 4
    $region41: #{tpu_custom_call.1} parent=1 // pred_fallthru
      _
    // Predicated region
    $region42: #{tpu_custom_call.1} parent=1 // pred_check
      _
    $region43: #{tpu_custom_call.1} parent=1 // pred_check_branch
      %131 = sbr.rel (0) target = $region45
    $region44: #{tpu_custom_call.1} parent=1 // pred_region
      _
    $region45: #{tpu_custom_call.1} parent=1 // pred_fallthru
      _
    // Predicated region
    $region46: #{tpu_custom_call.1} parent=1 // pred_check
      _
    $region47: #{tpu_custom_call.1} parent=1 // pred_check_branch
      %133 = sbr.rel (0) target = $region49
    $region48: #{tpu_custom_call.1} parent=1 // pred_region
      %135 = dma.done [#allocation4], 1024
    $region49: #{tpu_custom_call.1} parent=1 // pred_fallthru
      _
    // Predicated region
    $region50: #{tpu_custom_call.1} parent=1 // pred_check
      _
    $region51: #{tpu_custom_call.1} parent=1 // pred_check_branch
      %137 = sbr.rel (0) target = $region53
    $region52: #{tpu_custom_call.1} parent=1 // pred_region
      %139 = dma.done [#allocation7], 1024
    $region53: #{tpu_custom_call.1} parent=1 // pred_fallthru
      _
    // Predicated region
    $region54: #{tpu_custom_call.1} parent=1 // pred_check
      _
    $region55: #{tpu_custom_call.1} parent=1 // pred_check_branch
      %141 = sbr.rel (0) target = $region57
    $region56: #{tpu_custom_call.1} parent=1 // pred_region
      %143 = dma.done [#allocation7], 1024
    $region57: #{tpu_custom_call.1} parent=1 // pred_fallthru
      _
    // Predicated region
    $region58: #{tpu_custom_call.1} parent=1 // pred_check
      _
    $region59: #{tpu_custom_call.1} parent=1 // pred_check_branch
      %145 = sbr.rel (0) target = $region61
    $region60: #{tpu_custom_call.1} parent=1 // pred_region
      %147 = dma.done [#allocation10], 1024
    $region61: #{tpu_custom_call.1} parent=1 // pred_fallthru
      _
    // Predicated region
    $region62: #{tpu_custom_call.1} parent=1 // pred_check
      _
    $region63: #{tpu_custom_call.1} parent=1 // pred_check_branch
      %149 = sbr.rel (0) target = $region65
    $region64: #{tpu_custom_call.1} parent=1 // pred_region
      %151 = dma.done [#allocation10], 1024
    $region65: #{tpu_custom_call.1} parent=1 // pred_fallthru
      _
    // Predicated region
    $region66: #{tpu_custom_call.1} parent=1 // pred_check
      _
    $region67: #{tpu_custom_call.1} parent=1 // pred_check_branch
      %153 = sbr.rel (0) target = $region69
    $region68: #{tpu_custom_call.1} parent=1 // pred_region
      %155 = dma.done [#allocation13], 1024
    $region69: #{tpu_custom_call.1} parent=1 // pred_fallthru
      _
    // Predicated region
    $region70: #{tpu_custom_call.1} parent=1 // pred_check
      _
    $region71: #{tpu_custom_call.1} parent=1 // pred_check_branch
      %157 = sbr.rel (0) target = $region73
    $region72: #{tpu_custom_call.1} parent=1 // pred_region
      %159 = dma.done [#allocation13], 1024
    $region73: #{tpu_custom_call.1} parent=1 // pred_fallthru
      _
    // Predicated region
    $region74: #{tpu_custom_call.1} parent=1 // pred_check
      _
    $region75: #{tpu_custom_call.1} parent=1 // pred_check_branch
      %161 = sbr.rel (0) target = $region77
    $region76: #{tpu_custom_call.1} parent=1 // pred_region
      %163 = dma.done [#allocation16], 1024
    $region77: #{tpu_custom_call.1} parent=1 // pred_fallthru
      _
    %v164 = vld [vmem:[#allocation3] sm:$0xf]
    %v165 = vld [vmem:[#allocation3 + $0x4] sm:$0xf]
    %v166 = vld [vmem:[#allocation3 + $0x8] sm:$0xf]
    %v167 = vld [vmem:[#allocation3 + $0xc] sm:$0xf]
    %v168 = vld [vmem:[#allocation3 + $0x10] sm:$0xf]
    %v169 = vld [vmem:[#allocation3 + $0x14] sm:$0xf]
    %v170 = vld [vmem:[#allocation3 + $0x18] sm:$0xf]
    %v171 = vld [vmem:[#allocation3 + $0x1c] sm:$0xf]
    %v172 = vld [vmem:[#allocation3 + $0x20] sm:$0xf]
    %v173 = vld [vmem:[#allocation3 + $0x24] sm:$0xf]
    %v174 = vld [vmem:[#allocation3 + $0x28] sm:$0xf]
    %v175 = vld [vmem:[#allocation3 + $0x2c] sm:$0xf]
    %v176 = vld [vmem:[#allocation3 + $0x30] sm:$0xf]
    %v177 = vld [vmem:[#allocation3 + $0x34] sm:$0xf]
    %v178 = vld [vmem:[#allocation3 + $0x38] sm:$0xf]
    %v179 = vld [vmem:[#allocation3 + $0x3c] sm:$0xf]
    %v180 = vld [vmem:[#allocation6] sm:$0xf]
    %v181 = vld [vmem:[#allocation6 + $0x4] sm:$0xf]
    %v182 = vld [vmem:[#allocation6 + $0x8] sm:$0xf]
    %v183 = vld [vmem:[#allocation6 + $0xc] sm:$0xf]
    %v184 = vld [vmem:[#allocation6 + $0x10] sm:$0xf]
    %v185 = vld [vmem:[#allocation6 + $0x14] sm:$0xf]
    %v186 = vld [vmem:[#allocation6 + $0x18] sm:$0xf]
    %v187 = vld [vmem:[#allocation6 + $0x1c] sm:$0xf]
    %v188 = vld [vmem:[#allocation6 + $0x20] sm:$0xf]
    %v189 = vld [vmem:[#allocation6 + $0x24] sm:$0xf]
    %v190 = vld [vmem:[#allocation6 + $0x28] sm:$0xf]
    %v191 = vld [vmem:[#allocation6 + $0x2c] sm:$0xf]
    %v192 = vld [vmem:[#allocation6 + $0x30] sm:$0xf]
    %v193 = vld [vmem:[#allocation6 + $0x34] sm:$0xf]
    %v194 = vld [vmem:[#allocation6 + $0x38] sm:$0xf]
    %v195 = vld [vmem:[#allocation6 + $0x3c] sm:$0xf]
    %196 = vst [vmem:[#allocation2] sm:$0xf] %v180
    %197 = vst [vmem:[#allocation2 + $0x4] sm:$0xf] %v181
    %198 = vst [vmem:[#allocation2 + $0x8] sm:$0xf] %v182
    %199 = vst [vmem:[#allocation2 + $0xc] sm:$0xf] %v183
    %200 = vst [vmem:[#allocation2 + $0x10] sm:$0xf] %v184
    %201 = vst [vmem:[#allocation2 + $0x14] sm:$0xf] %v185
    %202 = vst [vmem:[#allocation2 + $0x18] sm:$0xf] %v186
    %203 = vst [vmem:[#allocation2 + $0x1c] sm:$0xf] %v187
    %204 = vst [vmem:[#allocation2 + $0x20] sm:$0xf] %v188
    %205 = vst [vmem:[#allocation2 + $0x24] sm:$0xf] %v189
    %206 = vst [vmem:[#allocation2 + $0x28] sm:$0xf] %v190
    %207 = vst [vmem:[#allocation2 + $0x2c] sm:$0xf] %v191
    %208 = vst [vmem:[#allocation2 + $0x30] sm:$0xf] %v192
    %209 = vst [vmem:[#allocation2 + $0x34] sm:$0xf] %v193
    %210 = vst [vmem:[#allocation2 + $0x38] sm:$0xf] %v194
    %211 = vst [vmem:[#allocation2 + $0x3c] sm:$0xf] %v195
    %v212 = vld [vmem:[#allocation8] sm:$0xf]
    %v213 = vld [vmem:[#allocation8 + $0x4] sm:$0xf]
    %v214 = vld [vmem:[#allocation8 + $0x8] sm:$0xf]
    %v215 = vld [vmem:[#allocation8 + $0xc] sm:$0xf]
    %v216 = vld [vmem:[#allocation8 + $0x10] sm:$0xf]
    %v217 = vld [vmem:[#allocation8 + $0x14] sm:$0xf]
    %v218 = vld [vmem:[#allocation8 + $0x18] sm:$0xf]
    %v219 = vld [vmem:[#allocation8 + $0x1c] sm:$0xf]
    %v220 = vld [vmem:[#allocation8 + $0x20] sm:$0xf]
    %v221 = vld [vmem:[#allocation8 + $0x24] sm:$0xf]
    %v222 = vld [vmem:[#allocation8 + $0x28] sm:$0xf]
    %v223 = vld [vmem:[#allocation8 + $0x2c] sm:$0xf]
    %v224 = vld [vmem:[#allocation8 + $0x30] sm:$0xf]
    %v225 = vld [vmem:[#allocation8 + $0x34] sm:$0xf]
    %v226 = vld [vmem:[#allocation8 + $0x38] sm:$0xf]
    %v227 = vld [vmem:[#allocation8 + $0x3c] sm:$0xf]
    %v228 = vld [vmem:[#allocation9] sm:$0xf]
    %v229 = vld [vmem:[#allocation9 + $0x4] sm:$0xf]
    %v230 = vld [vmem:[#allocation9 + $0x8] sm:$0xf]
    %v231 = vld [vmem:[#allocation9 + $0xc] sm:$0xf]
    %v232 = vld [vmem:[#allocation9 + $0x10] sm:$0xf]
    %v233 = vld [vmem:[#allocation9 + $0x14] sm:$0xf]
    %v234 = vld [vmem:[#allocation9 + $0x18] sm:$0xf]
    %v235 = vld [vmem:[#allocation9 + $0x1c] sm:$0xf]
    %v236 = vld [vmem:[#allocation9 + $0x20] sm:$0xf]
    %v237 = vld [vmem:[#allocation9 + $0x24] sm:$0xf]
    %v238 = vld [vmem:[#allocation9 + $0x28] sm:$0xf]
    %v239 = vld [vmem:[#allocation9 + $0x2c] sm:$0xf]
    %v240 = vld [vmem:[#allocation9 + $0x30] sm:$0xf]
    %v241 = vld [vmem:[#allocation9 + $0x34] sm:$0xf]
    %v242 = vld [vmem:[#allocation9 + $0x38] sm:$0xf]
    %v243 = vld [vmem:[#allocation9 + $0x3c] sm:$0xf]
    %v244 = vld [vmem:[%s4] sm:$0x1]
    %v245 = vld [vmem:[#allocation2] sm:$0xf]
    %v246 = vld [vmem:[#allocation2 + $0x4] sm:$0xf]
    %v247 = vld [vmem:[#allocation2 + $0x8] sm:$0xf]
    %v248 = vld [vmem:[#allocation2 + $0xc] sm:$0xf]
    %v249 = vld [vmem:[#allocation2 + $0x10] sm:$0xf]
    %v250 = vld [vmem:[#allocation2 + $0x14] sm:$0xf]
    %v251 = vld [vmem:[#allocation2 + $0x18] sm:$0xf]
    %v252 = vld [vmem:[#allocation2 + $0x1c] sm:$0xf]
    %v253 = vld [vmem:[#allocation2 + $0x20] sm:$0xf]
    %v254 = vld [vmem:[#allocation2 + $0x24] sm:$0xf]
    %v255 = vld [vmem:[#allocation2 + $0x28] sm:$0xf]
    %v256 = vld [vmem:[#allocation2 + $0x2c] sm:$0xf]
    %v257 = vld [vmem:[#allocation2 + $0x30] sm:$0xf]
    %v258 = vld [vmem:[#allocation2 + $0x34] sm:$0xf]
    %v259 = vld [vmem:[#allocation2 + $0x38] sm:$0xf]
    %v260 = vld [vmem:[#allocation2 + $0x3c] sm:$0xf]
    %v277 = vunpack.c.l.b16 %v164
    %v278 = vunpack.c.l.b16 %v165
    %v279 = vunpack.c.l.b16 %v166
    %v280 = vunpack.c.l.b16 %v167
    %v281 = vunpack.c.l.b16 %v168
    %v282 = vunpack.c.l.b16 %v169
    %v283 = vunpack.c.l.b16 %v170
    %v284 = vunpack.c.l.b16 %v171
    %v285 = vunpack.c.l.b16 %v172
    %v286 = vunpack.c.l.b16 %v173
    %v287 = vunpack.c.l.b16 %v174
    %v288 = vunpack.c.l.b16 %v175
    %v289 = vunpack.c.l.b16 %v176
    %v290 = vunpack.c.l.b16 %v177
    %v291 = vunpack.c.l.b16 %v178
    %v292 = vunpack.c.l.b16 %v179
    %v293 = vpack.c.b16 %v278, %v277
    %v294 = vpack.c.b16 %v280, %v279
    %v295 = vpack.c.b16 %v282, %v281
    %v296 = vpack.c.b16 %v284, %v283
    %v297 = vpack.c.b16 %v286, %v285
    %v298 = vpack.c.b16 %v288, %v287
    %v299 = vpack.c.b16 %v290, %v289
    %v300 = vpack.c.b16 %v292, %v291
    %v325 = vunpack.c.l.b16 %v245
    %v326 = vunpack.c.l.b16 %v246
    %v327 = vunpack.c.l.b16 %v247
    %v328 = vunpack.c.l.b16 %v248
    %v329 = vunpack.c.l.b16 %v249
    %v330 = vunpack.c.l.b16 %v250
    %v331 = vunpack.c.l.b16 %v251
    %v332 = vunpack.c.l.b16 %v252
    %v333 = vunpack.c.l.b16 %v253
    %v334 = vunpack.c.l.b16 %v254
    %v335 = vunpack.c.l.b16 %v255
    %v336 = vunpack.c.l.b16 %v256
    %v337 = vunpack.c.l.b16 %v257
    %v338 = vunpack.c.l.b16 %v258
    %v339 = vunpack.c.l.b16 %v259
    %v340 = vunpack.c.l.b16 %v260
    %v341 = vpack.c.b16 %v326, %v325
    %v342 = vpack.c.b16 %v328, %v327
    %v343 = vpack.c.b16 %v330, %v329
    %v344 = vpack.c.b16 %v332, %v331
    %v345 = vpack.c.b16 %v334, %v333
    %v346 = vpack.c.b16 %v336, %v335
    %v347 = vpack.c.b16 %v338, %v337
    %v348 = vpack.c.b16 %v340, %v339
    %357 = vmatpush.bf16.msra.mxu0 %v348
    %358 = vmatpush.bf16.msra.mxu0 %v347
    %359 = vmatpush.bf16.msra.mxu0 %v346
    %360 = vmatpush.bf16.msra.mxu0 %v345
    %361 = vmatpush.bf16.msra.mxu0 %v344
    %362 = vmatpush.bf16.msra.mxu0 %v343
    %363 = vmatpush.bf16.msra.mxu0 %v342
    %364 = vmatpush.bf16.msra.mxu0 %v341
    %365 = vmatmul.bf16.gmra.mxu0 %v293
    %v366 = vpop.f32.mrf.mxu0
    %v367 = vadd.f32 0.0, %v366
    %v368 = vpop.f32.mrf.mxu0
    %v369 = vadd.f32 0.0, %v368
    %370 = vmatmul.bf16.gmra.mxu0 %v294
    %v371 = vpop.f32.mrf.mxu0
    %v372 = vadd.f32 0.0, %v371
    %v373 = vpop.f32.mrf.mxu0
    %v374 = vadd.f32 0.0, %v373
    %375 = vmatmul.bf16.gmra.mxu0 %v295
    %v376 = vpop.f32.mrf.mxu0
    %v377 = vadd.f32 0.0, %v376
    %v378 = vpop.f32.mrf.mxu0
    %v379 = vadd.f32 0.0, %v378
    %380 = vmatmul.bf16.gmra.mxu0 %v296
    %v381 = vpop.f32.mrf.mxu0
    %v382 = vadd.f32 0.0, %v381
    %v383 = vpop.f32.mrf.mxu0
    %v384 = vadd.f32 0.0, %v383
    %385 = vmatmul.bf16.gmra.mxu0 %v297
    %v386 = vpop.f32.mrf.mxu0
    %v387 = vadd.f32 0.0, %v386
    %v388 = vpop.f32.mrf.mxu0
    %v389 = vadd.f32 0.0, %v388
    %390 = vmatmul.bf16.gmra.mxu0 %v298
    %v391 = vpop.f32.mrf.mxu0
    %v392 = vadd.f32 0.0, %v391
    %v393 = vpop.f32.mrf.mxu0
    %v394 = vadd.f32 0.0, %v393
    %395 = vmatmul.bf16.gmra.mxu0 %v299
    %v396 = vpop.f32.mrf.mxu0
    %v397 = vadd.f32 0.0, %v396
    %v398 = vpop.f32.mrf.mxu0
    %v399 = vadd.f32 0.0, %v398
    %400 = vmatmul.bf16.gmra.mxu0 %v300
    %v401 = vpop.f32.mrf.mxu0
    %v402 = vadd.f32 0.0, %v401
    %v403 = vpop.f32.mrf.mxu0
    %v404 = vadd.f32 0.0, %v403
    %405 = vdwg.mxu0
    %v406 = vpack.c.bf16 %v369, %v367
    %v407 = vpack.c.bf16 %v374, %v372
    %v408 = vpack.c.bf16 %v379, %v377
    %v409 = vpack.c.bf16 %v384, %v382
    %v410 = vpack.c.bf16 %v389, %v387
    %v411 = vpack.c.bf16 %v394, %v392
    %v412 = vpack.c.bf16 %v399, %v397
    %v413 = vpack.c.bf16 %v404, %v402
    %v430 = vunpack.c.l.b16 %v228
    %v431 = vunpack.c.l.b16 %v229
    %v432 = vunpack.c.l.b16 %v230
    %v433 = vunpack.c.l.b16 %v231
    %v434 = vunpack.c.l.b16 %v232
    %v435 = vunpack.c.l.b16 %v233
    %v436 = vunpack.c.l.b16 %v234
    %v437 = vunpack.c.l.b16 %v235
    %v438 = vunpack.c.l.b16 %v236
    %v439 = vunpack.c.l.b16 %v237
    %v440 = vunpack.c.l.b16 %v238
    %v441 = vunpack.c.l.b16 %v239
    %v442 = vunpack.c.l.b16 %v240
    %v443 = vunpack.c.l.b16 %v241
    %v444 = vunpack.c.l.b16 %v242
    %v445 = vunpack.c.l.b16 %v243
    %v446 = vpack.c.b16 %v431, %v430
    %v447 = vpack.c.b16 %v433, %v432
    %v448 = vpack.c.b16 %v435, %v434
    %v449 = vpack.c.b16 %v437, %v436
    %v450 = vpack.c.b16 %v439, %v438
    %v451 = vpack.c.b16 %v441, %v440
    %v452 = vpack.c.b16 %v443, %v442
    %v453 = vpack.c.b16 %v445, %v444
    %462 = vmatpush.bf16.msra.mxu0 %v453
    %463 = vmatpush.bf16.msra.mxu0 %v452
    %464 = vmatpush.bf16.msra.mxu0 %v451
    %465 = vmatpush.bf16.msra.mxu0 %v450
    %466 = vmatpush.bf16.msra.mxu0 %v449
    %467 = vmatpush.bf16.msra.mxu0 %v448
    %468 = vmatpush.bf16.msra.mxu0 %v447
    %469 = vmatpush.bf16.msra.mxu0 %v446
    %470 = vmatmul.bf16.gmra.mxu0 %v341
    %v471 = vpop.f32.mrf.mxu0
    %v472 = vadd.f32 0.0, %v471
    %v473 = vpop.f32.mrf.mxu0
    %v474 = vadd.f32 0.0, %v473
    %475 = vmatmul.bf16.gmra.mxu0 %v342
    %v476 = vpop.f32.mrf.mxu0
    %v477 = vadd.f32 0.0, %v476
    %v478 = vpop.f32.mrf.mxu0
    %v479 = vadd.f32 0.0, %v478
    %480 = vmatmul.bf16.gmra.mxu0 %v343
    %v481 = vpop.f32.mrf.mxu0
    %v482 = vadd.f32 0.0, %v481
    %v483 = vpop.f32.mrf.mxu0
    %v484 = vadd.f32 0.0, %v483
    %485 = vmatmul.bf16.gmra.mxu0 %v344
    %v486 = vpop.f32.mrf.mxu0
    %v487 = vadd.f32 0.0, %v486
    %v488 = vpop.f32.mrf.mxu0
    %v489 = vadd.f32 0.0, %v488
    %490 = vmatmul.bf16.gmra.mxu0 %v345
    %v491 = vpop.f32.mrf.mxu0
    %v492 = vadd.f32 0.0, %v491
    %v493 = vpop.f32.mrf.mxu0
    %v494 = vadd.f32 0.0, %v493
    %495 = vmatmul.bf16.gmra.mxu0 %v346
    %v496 = vpop.f32.mrf.mxu0
    %v497 = vadd.f32 0.0, %v496
    %v498 = vpop.f32.mrf.mxu0
    %v499 = vadd.f32 0.0, %v498
    %500 = vmatmul.bf16.gmra.mxu0 %v347
    %v501 = vpop.f32.mrf.mxu0
    %v502 = vadd.f32 0.0, %v501
    %v503 = vpop.f32.mrf.mxu0
    %v504 = vadd.f32 0.0, %v503
    %505 = vmatmul.bf16.gmra.mxu0 %v348
    %v506 = vpop.f32.mrf.mxu0
    %v507 = vadd.f32 0.0, %v506
    %v508 = vpop.f32.mrf.mxu0
    %v509 = vadd.f32 0.0, %v508
    %510 = vdwg.mxu0
    %v527 = vunpack.c.l.b16 %v212
    %v528 = vunpack.c.l.b16 %v213
    %v529 = vunpack.c.l.b16 %v214
    %v530 = vunpack.c.l.b16 %v215
    %v531 = vunpack.c.l.b16 %v216
    %v532 = vunpack.c.l.b16 %v217
    %v533 = vunpack.c.l.b16 %v218
    %v534 = vunpack.c.l.b16 %v219
    %v535 = vunpack.c.l.b16 %v220
    %v536 = vunpack.c.l.b16 %v221
    %v537 = vunpack.c.l.b16 %v222
    %v538 = vunpack.c.l.b16 %v223
    %v539 = vunpack.c.l.b16 %v224
    %v540 = vunpack.c.l.b16 %v225
    %v541 = vunpack.c.l.b16 %v226
    %v542 = vunpack.c.l.b16 %v227
    %v543 = vpack.c.b16 %v528, %v527
    %v544 = vpack.c.b16 %v530, %v529
    %v545 = vpack.c.b16 %v532, %v531
    %v546 = vpack.c.b16 %v534, %v533
    %v547 = vpack.c.b16 %v536, %v535
    %v548 = vpack.c.b16 %v538, %v537
    %v549 = vpack.c.b16 %v540, %v539
    %v550 = vpack.c.b16 %v542, %v541
    %559 = vmatpush.bf16.msra.mxu0 %v550
    %560 = vmatpush.bf16.msra.mxu0 %v549
    %561 = vmatpush.bf16.msra.mxu0 %v548
    %562 = vmatpush.bf16.msra.mxu0 %v547
    %563 = vmatpush.bf16.msra.mxu0 %v546
    %564 = vmatpush.bf16.msra.mxu0 %v545
    %565 = vmatpush.bf16.msra.mxu0 %v544
    %566 = vmatpush.bf16.msra.mxu0 %v543
    %567 = vmatmul.bf16.gmra.mxu0 %v406
    %v568 = vpop.f32.mrf.mxu0
    %v569 = vadd.f32 %v472, %v568
    %v570 = vpop.f32.mrf.mxu0
    %v571 = vadd.f32 %v474, %v570
    %572 = vmatmul.bf16.gmra.mxu0 %v407
    %v573 = vpop.f32.mrf.mxu0
    %v574 = vadd.f32 %v477, %v573
    %v575 = vpop.f32.mrf.mxu0
    %v576 = vadd.f32 %v479, %v575
    %577 = vmatmul.bf16.gmra.mxu0 %v408
    %v578 = vpop.f32.mrf.mxu0
    %v579 = vadd.f32 %v482, %v578
    %v580 = vpop.f32.mrf.mxu0
    %v581 = vadd.f32 %v484, %v580
    %582 = vmatmul.bf16.gmra.mxu0 %v409
    %v583 = vpop.f32.mrf.mxu0
    %v584 = vadd.f32 %v487, %v583
    %v585 = vpop.f32.mrf.mxu0
    %v586 = vadd.f32 %v489, %v585
    %587 = vmatmul.bf16.gmra.mxu0 %v410
    %v588 = vpop.f32.mrf.mxu0
    %v589 = vadd.f32 %v492, %v588
    %v590 = vpop.f32.mrf.mxu0
    %v591 = vadd.f32 %v494, %v590
    %592 = vmatmul.bf16.gmra.mxu0 %v411
    %v593 = vpop.f32.mrf.mxu0
    %v594 = vadd.f32 %v497, %v593
    %v595 = vpop.f32.mrf.mxu0
    %v596 = vadd.f32 %v499, %v595
    %597 = vmatmul.bf16.gmra.mxu0 %v412
    %v598 = vpop.f32.mrf.mxu0
    %v599 = vadd.f32 %v502, %v598
    %v600 = vpop.f32.mrf.mxu0
    %v601 = vadd.f32 %v504, %v600
    %602 = vmatmul.bf16.gmra.mxu0 %v413
    %v603 = vpop.f32.mrf.mxu0
    %v604 = vadd.f32 %v507, %v603
    %v605 = vpop.f32.mrf.mxu0
    %v606 = vadd.f32 %v509, %v605
    %607 = vdwg.mxu0
    %v609 = vperm.slane %v244, 0
    %v611 = vadd.f32 %v569, %v609
    %v612 = vadd.f32 %v571, %v609
    %v613 = vadd.f32 %v574, %v609
    %v614 = vadd.f32 %v576, %v609
    %v615 = vadd.f32 %v579, %v609
    %v616 = vadd.f32 %v581, %v609
    %v617 = vadd.f32 %v584, %v609
    %v618 = vadd.f32 %v586, %v609
    %v619 = vadd.f32 %v589, %v609
    %v620 = vadd.f32 %v591, %v609
    %v621 = vadd.f32 %v594, %v609
    %v622 = vadd.f32 %v596, %v609
    %v623 = vadd.f32 %v599, %v609
    %v624 = vadd.f32 %v601, %v609
    %v625 = vadd.f32 %v604, %v609
    %v626 = vadd.f32 %v606, %v609
    %v627 = vmax.f32 %v611, 0.0
    %v628 = vmax.f32 %v612, 0.0
    %v629 = vmax.f32 %v613, 0.0
    %v630 = vmax.f32 %v614, 0.0
    %v631 = vmax.f32 %v615, 0.0
    %v632 = vmax.f32 %v616, 0.0
    %v633 = vmax.f32 %v617, 0.0
    %v634 = vmax.f32 %v618, 0.0
    %v635 = vmax.f32 %v619, 0.0
    %v636 = vmax.f32 %v620, 0.0
    %v637 = vmax.f32 %v621, 0.0
    %v638 = vmax.f32 %v622, 0.0
    %v639 = vmax.f32 %v623, 0.0
    %v640 = vmax.f32 %v624, 0.0
    %v641 = vmax.f32 %v625, 0.0
    %v642 = vmax.f32 %v626, 0.0
    %v643 = vpack.c.bf16 %v627, %v627
    %v644 = vpack.c.bf16 %v628, %v628
    %v645 = vpack.c.bf16 %v629, %v629
    %v646 = vpack.c.bf16 %v630, %v630
    %v647 = vpack.c.bf16 %v631, %v631
    %v648 = vpack.c.bf16 %v632, %v632
    %v649 = vpack.c.bf16 %v633, %v633
    %v650 = vpack.c.bf16 %v634, %v634
    %v651 = vpack.c.bf16 %v635, %v635
    %v652 = vpack.c.bf16 %v636, %v636
    %v653 = vpack.c.bf16 %v637, %v637
    %v654 = vpack.c.bf16 %v638, %v638
    %v655 = vpack.c.bf16 %v639, %v639
    %v656 = vpack.c.bf16 %v640, %v640
    %v657 = vpack.c.bf16 %v641, %v641
    %v658 = vpack.c.bf16 %v642, %v642
    %659 = vst [vmem:[#allocation2] sm:$0xf] %v643
    %660 = vst [vmem:[#allocation2 + $0x4] sm:$0xf] %v644
    %661 = vst [vmem:[#allocation2 + $0x8] sm:$0xf] %v645
    %662 = vst [vmem:[#allocation2 + $0xc] sm:$0xf] %v646
    %663 = vst [vmem:[#allocation2 + $0x10] sm:$0xf] %v647
    %664 = vst [vmem:[#allocation2 + $0x14] sm:$0xf] %v648
    %665 = vst [vmem:[#allocation2 + $0x18] sm:$0xf] %v649
    %666 = vst [vmem:[#allocation2 + $0x1c] sm:$0xf] %v650
    %667 = vst [vmem:[#allocation2 + $0x20] sm:$0xf] %v651
    %668 = vst [vmem:[#allocation2 + $0x24] sm:$0xf] %v652
    %669 = vst [vmem:[#allocation2 + $0x28] sm:$0xf] %v653
    %670 = vst [vmem:[#allocation2 + $0x2c] sm:$0xf] %v654
    %671 = vst [vmem:[#allocation2 + $0x30] sm:$0xf] %v655
    %672 = vst [vmem:[#allocation2 + $0x34] sm:$0xf] %v656
    %673 = vst [vmem:[#allocation2 + $0x38] sm:$0xf] %v657
    %674 = vst [vmem:[#allocation2 + $0x3c] sm:$0xf] %v658
    %v675 = vld [vmem:[#allocation11] sm:$0xf]
    %v676 = vld [vmem:[#allocation11 + $0x4] sm:$0xf]
    %v677 = vld [vmem:[#allocation11 + $0x8] sm:$0xf]
    %v678 = vld [vmem:[#allocation11 + $0xc] sm:$0xf]
    %v679 = vld [vmem:[#allocation11 + $0x10] sm:$0xf]
    %v680 = vld [vmem:[#allocation11 + $0x14] sm:$0xf]
    %v681 = vld [vmem:[#allocation11 + $0x18] sm:$0xf]
    %v682 = vld [vmem:[#allocation11 + $0x1c] sm:$0xf]
    %v683 = vld [vmem:[#allocation11 + $0x20] sm:$0xf]
    %v684 = vld [vmem:[#allocation11 + $0x24] sm:$0xf]
    %v685 = vld [vmem:[#allocation11 + $0x28] sm:$0xf]
    %v686 = vld [vmem:[#allocation11 + $0x2c] sm:$0xf]
    %v687 = vld [vmem:[#allocation11 + $0x30] sm:$0xf]
    %v688 = vld [vmem:[#allocation11 + $0x34] sm:$0xf]
    %v689 = vld [vmem:[#allocation11 + $0x38] sm:$0xf]
    %v690 = vld [vmem:[#allocation11 + $0x3c] sm:$0xf]
    %v691 = vld [vmem:[#allocation12] sm:$0xf]
    %v692 = vld [vmem:[#allocation12 + $0x4] sm:$0xf]
    %v693 = vld [vmem:[#allocation12 + $0x8] sm:$0xf]
    %v694 = vld [vmem:[#allocation12 + $0xc] sm:$0xf]
    %v695 = vld [vmem:[#allocation12 + $0x10] sm:$0xf]
    %v696 = vld [vmem:[#allocation12 + $0x14] sm:$0xf]
    %v697 = vld [vmem:[#allocation12 + $0x18] sm:$0xf]
    %v698 = vld [vmem:[#allocation12 + $0x1c] sm:$0xf]
    %v699 = vld [vmem:[#allocation12 + $0x20] sm:$0xf]
    %v700 = vld [vmem:[#allocation12 + $0x24] sm:$0xf]
    %v701 = vld [vmem:[#allocation12 + $0x28] sm:$0xf]
    %v702 = vld [vmem:[#allocation12 + $0x2c] sm:$0xf]
    %v703 = vld [vmem:[#allocation12 + $0x30] sm:$0xf]
    %v704 = vld [vmem:[#allocation12 + $0x34] sm:$0xf]
    %v705 = vld [vmem:[#allocation12 + $0x38] sm:$0xf]
    %v706 = vld [vmem:[#allocation12 + $0x3c] sm:$0xf]
    %v707 = vld [vmem:[%s7] sm:$0x1]
    %v708 = vld [vmem:[#allocation2] sm:$0xf]
    %v709 = vld [vmem:[#allocation2 + $0x4] sm:$0xf]
    %v710 = vld [vmem:[#allocation2 + $0x8] sm:$0xf]
    %v711 = vld [vmem:[#allocation2 + $0xc] sm:$0xf]
    %v712 = vld [vmem:[#allocation2 + $0x10] sm:$0xf]
    %v713 = vld [vmem:[#allocation2 + $0x14] sm:$0xf]
    %v714 = vld [vmem:[#allocation2 + $0x18] sm:$0xf]
    %v715 = vld [vmem:[#allocation2 + $0x1c] sm:$0xf]
    %v716 = vld [vmem:[#allocation2 + $0x20] sm:$0xf]
    %v717 = vld [vmem:[#allocation2 + $0x24] sm:$0xf]
    %v718 = vld [vmem:[#allocation2 + $0x28] sm:$0xf]
    %v719 = vld [vmem:[#allocation2 + $0x2c] sm:$0xf]
    %v720 = vld [vmem:[#allocation2 + $0x30] sm:$0xf]
    %v721 = vld [vmem:[#allocation2 + $0x34] sm:$0xf]
    %v722 = vld [vmem:[#allocation2 + $0x38] sm:$0xf]
    %v723 = vld [vmem:[#allocation2 + $0x3c] sm:$0xf]
    %v740 = vunpack.c.l.b16 %v708
    %v741 = vunpack.c.l.b16 %v709
    %v742 = vunpack.c.l.b16 %v710
    %v743 = vunpack.c.l.b16 %v711
    %v744 = vunpack.c.l.b16 %v712
    %v745 = vunpack.c.l.b16 %v713
    %v746 = vunpack.c.l.b16 %v714
    %v747 = vunpack.c.l.b16 %v715
    %v748 = vunpack.c.l.b16 %v716
    %v749 = vunpack.c.l.b16 %v717
    %v750 = vunpack.c.l.b16 %v718
    %v751 = vunpack.c.l.b16 %v719
    %v752 = vunpack.c.l.b16 %v720
    %v753 = vunpack.c.l.b16 %v721
    %v754 = vunpack.c.l.b16 %v722
    %v755 = vunpack.c.l.b16 %v723
    %v756 = vpack.c.b16 %v741, %v740
    %v757 = vpack.c.b16 %v743, %v742
    %v758 = vpack.c.b16 %v745, %v744
    %v759 = vpack.c.b16 %v747, %v746
    %v760 = vpack.c.b16 %v749, %v748
    %v761 = vpack.c.b16 %v751, %v750
    %v762 = vpack.c.b16 %v753, %v752
    %v763 = vpack.c.b16 %v755, %v754
    %772 = vmatpush.bf16.msra.mxu0 %v763
    %773 = vmatpush.bf16.msra.mxu0 %v762
    %774 = vmatpush.bf16.msra.mxu0 %v761
    %775 = vmatpush.bf16.msra.mxu0 %v760
    %776 = vmatpush.bf16.msra.mxu0 %v759
    %777 = vmatpush.bf16.msra.mxu0 %v758
    %778 = vmatpush.bf16.msra.mxu0 %v757
    %779 = vmatpush.bf16.msra.mxu0 %v756
    %780 = vmatmul.bf16.gmra.mxu0 %v293
    %v781 = vpop.f32.mrf.mxu0
    %v782 = vadd.f32 0.0, %v781
    %v783 = vpop.f32.mrf.mxu0
    %v784 = vadd.f32 0.0, %v783
    %785 = vmatmul.bf16.gmra.mxu0 %v294
    %v786 = vpop.f32.mrf.mxu0
    %v787 = vadd.f32 0.0, %v786
    %v788 = vpop.f32.mrf.mxu0
    %v789 = vadd.f32 0.0, %v788
    %790 = vmatmul.bf16.gmra.mxu0 %v295
    %v791 = vpop.f32.mrf.mxu0
    %v792 = vadd.f32 0.0, %v791
    %v793 = vpop.f32.mrf.mxu0
    %v794 = vadd.f32 0.0, %v793
    %795 = vmatmul.bf16.gmra.mxu0 %v296
    %v796 = vpop.f32.mrf.mxu0
    %v797 = vadd.f32 0.0, %v796
    %v798 = vpop.f32.mrf.mxu0
    %v799 = vadd.f32 0.0, %v798
    %800 = vmatmul.bf16.gmra.mxu0 %v297
    %v801 = vpop.f32.mrf.mxu0
    %v802 = vadd.f32 0.0, %v801
    %v803 = vpop.f32.mrf.mxu0
    %v804 = vadd.f32 0.0, %v803
    %805 = vmatmul.bf16.gmra.mxu0 %v298
    %v806 = vpop.f32.mrf.mxu0
    %v807 = vadd.f32 0.0, %v806
    %v808 = vpop.f32.mrf.mxu0
    %v809 = vadd.f32 0.0, %v808
    %810 = vmatmul.bf16.gmra.mxu0 %v299
    %v811 = vpop.f32.mrf.mxu0
    %v812 = vadd.f32 0.0, %v811
    %v813 = vpop.f32.mrf.mxu0
    %v814 = vadd.f32 0.0, %v813
    %815 = vmatmul.bf16.gmra.mxu0 %v300
    %v816 = vpop.f32.mrf.mxu0
    %v817 = vadd.f32 0.0, %v816
    %v818 = vpop.f32.mrf.mxu0
    %v819 = vadd.f32 0.0, %v818
    %820 = vdwg.mxu0
    %v821 = vpack.c.bf16 %v784, %v782
    %v822 = vpack.c.bf16 %v789, %v787
    %v823 = vpack.c.bf16 %v794, %v792
    %v824 = vpack.c.bf16 %v799, %v797
    %v825 = vpack.c.bf16 %v804, %v802
    %v826 = vpack.c.bf16 %v809, %v807
    %v827 = vpack.c.bf16 %v814, %v812
    %v828 = vpack.c.bf16 %v819, %v817
    %v845 = vunpack.c.l.b16 %v691
    %v846 = vunpack.c.l.b16 %v692
    %v847 = vunpack.c.l.b16 %v693
    %v848 = vunpack.c.l.b16 %v694
    %v849 = vunpack.c.l.b16 %v695
    %v850 = vunpack.c.l.b16 %v696
    %v851 = vunpack.c.l.b16 %v697
    %v852 = vunpack.c.l.b16 %v698
    %v853 = vunpack.c.l.b16 %v699
    %v854 = vunpack.c.l.b16 %v700
    %v855 = vunpack.c.l.b16 %v701
    %v856 = vunpack.c.l.b16 %v702
    %v857 = vunpack.c.l.b16 %v703
    %v858 = vunpack.c.l.b16 %v704
    %v859 = vunpack.c.l.b16 %v705
    %v860 = vunpack.c.l.b16 %v706
    %v861 = vpack.c.b16 %v846, %v845
    %v862 = vpack.c.b16 %v848, %v847
    %v863 = vpack.c.b16 %v850, %v849
    %v864 = vpack.c.b16 %v852, %v851
    %v865 = vpack.c.b16 %v854, %v853
    %v866 = vpack.c.b16 %v856, %v855
    %v867 = vpack.c.b16 %v858, %v857
    %v868 = vpack.c.b16 %v860, %v859
    %877 = vmatpush.bf16.msra.mxu0 %v868
    %878 = vmatpush.bf16.msra.mxu0 %v867
    %879 = vmatpush.bf16.msra.mxu0 %v866
    %880 = vmatpush.bf16.msra.mxu0 %v865
    %881 = vmatpush.bf16.msra.mxu0 %v864
    %882 = vmatpush.bf16.msra.mxu0 %v863
    %883 = vmatpush.bf16.msra.mxu0 %v862
    %884 = vmatpush.bf16.msra.mxu0 %v861
    %885 = vmatmul.bf16.gmra.mxu0 %v756
    %v886 = vpop.f32.mrf.mxu0
    %v887 = vadd.f32 0.0, %v886
    %v888 = vpop.f32.mrf.mxu0
    %v889 = vadd.f32 0.0, %v888
    %890 = vmatmul.bf16.gmra.mxu0 %v757
    %v891 = vpop.f32.mrf.mxu0
    %v892 = vadd.f32 0.0, %v891
    %v893 = vpop.f32.mrf.mxu0
    %v894 = vadd.f32 0.0, %v893
    %895 = vmatmul.bf16.gmra.mxu0 %v758
    %v896 = vpop.f32.mrf.mxu0
    %v897 = vadd.f32 0.0, %v896
    %v898 = vpop.f32.mrf.mxu0
    %v899 = vadd.f32 0.0, %v898
    %900 = vmatmul.bf16.gmra.mxu0 %v759
    %v901 = vpop.f32.mrf.mxu0
    %v902 = vadd.f32 0.0, %v901
    %v903 = vpop.f32.mrf.mxu0
    %v904 = vadd.f32 0.0, %v903
    %905 = vmatmul.bf16.gmra.mxu0 %v760
    %v906 = vpop.f32.mrf.mxu0
    %v907 = vadd.f32 0.0, %v906
    %v908 = vpop.f32.mrf.mxu0
    %v909 = vadd.f32 0.0, %v908
    %910 = vmatmul.bf16.gmra.mxu0 %v761
    %v911 = vpop.f32.mrf.mxu0
    %v912 = vadd.f32 0.0, %v911
    %v913 = vpop.f32.mrf.mxu0
    %v914 = vadd.f32 0.0, %v913
    %915 = vmatmul.bf16.gmra.mxu0 %v762
    %v916 = vpop.f32.mrf.mxu0
    %v917 = vadd.f32 0.0, %v916
    %v918 = vpop.f32.mrf.mxu0
    %v919 = vadd.f32 0.0, %v918
    %920 = vmatmul.bf16.gmra.mxu0 %v763
    %v921 = vpop.f32.mrf.mxu0
    %v922 = vadd.f32 0.0, %v921
    %v923 = vpop.f32.mrf.mxu0
    %v924 = vadd.f32 0.0, %v923
    %925 = vdwg.mxu0
    %v942 = vunpack.c.l.b16 %v675
    %v943 = vunpack.c.l.b16 %v676
    %v944 = vunpack.c.l.b16 %v677
    %v945 = vunpack.c.l.b16 %v678
    %v946 = vunpack.c.l.b16 %v679
    %v947 = vunpack.c.l.b16 %v680
    %v948 = vunpack.c.l.b16 %v681
    %v949 = vunpack.c.l.b16 %v682
    %v950 = vunpack.c.l.b16 %v683
    %v951 = vunpack.c.l.b16 %v684
    %v952 = vunpack.c.l.b16 %v685
    %v953 = vunpack.c.l.b16 %v686
    %v954 = vunpack.c.l.b16 %v687
    %v955 = vunpack.c.l.b16 %v688
    %v956 = vunpack.c.l.b16 %v689
    %v957 = vunpack.c.l.b16 %v690
    %v958 = vpack.c.b16 %v943, %v942
    %v959 = vpack.c.b16 %v945, %v944
    %v960 = vpack.c.b16 %v947, %v946
    %v961 = vpack.c.b16 %v949, %v948
    %v962 = vpack.c.b16 %v951, %v950
    %v963 = vpack.c.b16 %v953, %v952
    %v964 = vpack.c.b16 %v955, %v954
    %v965 = vpack.c.b16 %v957, %v956
    %974 = vmatpush.bf16.msra.mxu0 %v965
    %975 = vmatpush.bf16.msra.mxu0 %v964
    %976 = vmatpush.bf16.msra.mxu0 %v963
    %977 = vmatpush.bf16.msra.mxu0 %v962
    %978 = vmatpush.bf16.msra.mxu0 %v961
    %979 = vmatpush.bf16.msra.mxu0 %v960
    %980 = vmatpush.bf16.msra.mxu0 %v959
    %981 = vmatpush.bf16.msra.mxu0 %v958
    %982 = vmatmul.bf16.gmra.mxu0 %v821
    %v983 = vpop.f32.mrf.mxu0
    %v984 = vadd.f32 %v887, %v983
    %v985 = vpop.f32.mrf.mxu0
    %v986 = vadd.f32 %v889, %v985
    %987 = vmatmul.bf16.gmra.mxu0 %v822
    %v988 = vpop.f32.mrf.mxu0
    %v989 = vadd.f32 %v892, %v988
    %v990 = vpop.f32.mrf.mxu0
    %v991 = vadd.f32 %v894, %v990
    %992 = vmatmul.bf16.gmra.mxu0 %v823
    %v993 = vpop.f32.mrf.mxu0
    %v994 = vadd.f32 %v897, %v993
    %v995 = vpop.f32.mrf.mxu0
    %v996 = vadd.f32 %v899, %v995
    %997 = vmatmul.bf16.gmra.mxu0 %v824
    %v998 = vpop.f32.mrf.mxu0
    %v999 = vadd.f32 %v902, %v998
    %v1000 = vpop.f32.mrf.mxu0
    %v1001 = vadd.f32 %v904, %v1000
    %1002 = vmatmul.bf16.gmra.mxu0 %v825
    %v1003 = vpop.f32.mrf.mxu0
    %v1004 = vadd.f32 %v907, %v1003
    %v1005 = vpop.f32.mrf.mxu0
    %v1006 = vadd.f32 %v909, %v1005
    %1007 = vmatmul.bf16.gmra.mxu0 %v826
    %v1008 = vpop.f32.mrf.mxu0
    %v1009 = vadd.f32 %v912, %v1008
    %v1010 = vpop.f32.mrf.mxu0
    %v1011 = vadd.f32 %v914, %v1010
    %1012 = vmatmul.bf16.gmra.mxu0 %v827
    %v1013 = vpop.f32.mrf.mxu0
    %v1014 = vadd.f32 %v917, %v1013
    %v1015 = vpop.f32.mrf.mxu0
    %v1016 = vadd.f32 %v919, %v1015
    %1017 = vmatmul.bf16.gmra.mxu0 %v828
    %v1018 = vpop.f32.mrf.mxu0
    %v1019 = vadd.f32 %v922, %v1018
    %v1020 = vpop.f32.mrf.mxu0
    %v1021 = vadd.f32 %v924, %v1020
    %1022 = vdwg.mxu0
    %v1024 = vperm.slane %v707, 0
    %v1026 = vadd.f32 %v984, %v1024
    %v1027 = vadd.f32 %v986, %v1024
    %v1028 = vadd.f32 %v989, %v1024
    %v1029 = vadd.f32 %v991, %v1024
    %v1030 = vadd.f32 %v994, %v1024
    %v1031 = vadd.f32 %v996, %v1024
    %v1032 = vadd.f32 %v999, %v1024
    %v1033 = vadd.f32 %v1001, %v1024
    %v1034 = vadd.f32 %v1004, %v1024
    %v1035 = vadd.f32 %v1006, %v1024
    %v1036 = vadd.f32 %v1009, %v1024
    %v1037 = vadd.f32 %v1011, %v1024
    %v1038 = vadd.f32 %v1014, %v1024
    %v1039 = vadd.f32 %v1016, %v1024
    %v1040 = vadd.f32 %v1019, %v1024
    %v1041 = vadd.f32 %v1021, %v1024
    %v1042 = vmax.f32 %v1026, 0.0
    %v1043 = vmax.f32 %v1027, 0.0
    %v1044 = vmax.f32 %v1028, 0.0
    %v1045 = vmax.f32 %v1029, 0.0
    %v1046 = vmax.f32 %v1030, 0.0
    %v1047 = vmax.f32 %v1031, 0.0
    %v1048 = vmax.f32 %v1032, 0.0
    %v1049 = vmax.f32 %v1033, 0.0
    %v1050 = vmax.f32 %v1034, 0.0
    %v1051 = vmax.f32 %v1035, 0.0
    %v1052 = vmax.f32 %v1036, 0.0
    %v1053 = vmax.f32 %v1037, 0.0
    %v1054 = vmax.f32 %v1038, 0.0
    %v1055 = vmax.f32 %v1039, 0.0
    %v1056 = vmax.f32 %v1040, 0.0
    %v1057 = vmax.f32 %v1041, 0.0
    %v1058 = vpack.c.bf16 %v1042, %v1042
    %v1059 = vpack.c.bf16 %v1043, %v1043
    %v1060 = vpack.c.bf16 %v1044, %v1044
    %v1061 = vpack.c.bf16 %v1045, %v1045
    %v1062 = vpack.c.bf16 %v1046, %v1046
    %v1063 = vpack.c.bf16 %v1047, %v1047
    %v1064 = vpack.c.bf16 %v1048, %v1048
    %v1065 = vpack.c.bf16 %v1049, %v1049
    %v1066 = vpack.c.bf16 %v1050, %v1050
    %v1067 = vpack.c.bf16 %v1051, %v1051
    %v1068 = vpack.c.bf16 %v1052, %v1052
    %v1069 = vpack.c.bf16 %v1053, %v1053
    %v1070 = vpack.c.bf16 %v1054, %v1054
    %v1071 = vpack.c.bf16 %v1055, %v1055
    %v1072 = vpack.c.bf16 %v1056, %v1056
    %v1073 = vpack.c.bf16 %v1057, %v1057
    %1074 = vst [vmem:[#allocation2] sm:$0xf] %v1058
    %1075 = vst [vmem:[#allocation2 + $0x4] sm:$0xf] %v1059
    %1076 = vst [vmem:[#allocation2 + $0x8] sm:$0xf] %v1060
    %1077 = vst [vmem:[#allocation2 + $0xc] sm:$0xf] %v1061
    %1078 = vst [vmem:[#allocation2 + $0x10] sm:$0xf] %v1062
    %1079 = vst [vmem:[#allocation2 + $0x14] sm:$0xf] %v1063
    %1080 = vst [vmem:[#allocation2 + $0x18] sm:$0xf] %v1064
    %1081 = vst [vmem:[#allocation2 + $0x1c] sm:$0xf] %v1065
    %1082 = vst [vmem:[#allocation2 + $0x20] sm:$0xf] %v1066
    %1083 = vst [vmem:[#allocation2 + $0x24] sm:$0xf] %v1067
    %1084 = vst [vmem:[#allocation2 + $0x28] sm:$0xf] %v1068
    %1085 = vst [vmem:[#allocation2 + $0x2c] sm:$0xf] %v1069
    %1086 = vst [vmem:[#allocation2 + $0x30] sm:$0xf] %v1070
    %1087 = vst [vmem:[#allocation2 + $0x34] sm:$0xf] %v1071
    %1088 = vst [vmem:[#allocation2 + $0x38] sm:$0xf] %v1072
    %1089 = vst [vmem:[#allocation2 + $0x3c] sm:$0xf] %v1073
    %v1090 = vld [vmem:[#allocation14] sm:$0xf]
    %v1091 = vld [vmem:[#allocation14 + $0x4] sm:$0xf]
    %v1092 = vld [vmem:[#allocation14 + $0x8] sm:$0xf]
    %v1093 = vld [vmem:[#allocation14 + $0xc] sm:$0xf]
    %v1094 = vld [vmem:[#allocation14 + $0x10] sm:$0xf]
    %v1095 = vld [vmem:[#allocation14 + $0x14] sm:$0xf]
    %v1096 = vld [vmem:[#allocation14 + $0x18] sm:$0xf]
    %v1097 = vld [vmem:[#allocation14 + $0x1c] sm:$0xf]
    %v1098 = vld [vmem:[#allocation14 + $0x20] sm:$0xf]
    %v1099 = vld [vmem:[#allocation14 + $0x24] sm:$0xf]
    %v1100 = vld [vmem:[#allocation14 + $0x28] sm:$0xf]
    %v1101 = vld [vmem:[#allocation14 + $0x2c] sm:$0xf]
    %v1102 = vld [vmem:[#allocation14 + $0x30] sm:$0xf]
    %v1103 = vld [vmem:[#allocation14 + $0x34] sm:$0xf]
    %v1104 = vld [vmem:[#allocation14 + $0x38] sm:$0xf]
    %v1105 = vld [vmem:[#allocation14 + $0x3c] sm:$0xf]
    %v1106 = vld [vmem:[#allocation15] sm:$0xf]
    %v1107 = vld [vmem:[#allocation15 + $0x4] sm:$0xf]
    %v1108 = vld [vmem:[#allocation15 + $0x8] sm:$0xf]
    %v1109 = vld [vmem:[#allocation15 + $0xc] sm:$0xf]
    %v1110 = vld [vmem:[#allocation15 + $0x10] sm:$0xf]
    %v1111 = vld [vmem:[#allocation15 + $0x14] sm:$0xf]
    %v1112 = vld [vmem:[#allocation15 + $0x18] sm:$0xf]
    %v1113 = vld [vmem:[#allocation15 + $0x1c] sm:$0xf]
    %v1114 = vld [vmem:[#allocation15 + $0x20] sm:$0xf]
    %v1115 = vld [vmem:[#allocation15 + $0x24] sm:$0xf]
    %v1116 = vld [vmem:[#allocation15 + $0x28] sm:$0xf]
    %v1117 = vld [vmem:[#allocation15 + $0x2c] sm:$0xf]
    %v1118 = vld [vmem:[#allocation15 + $0x30] sm:$0xf]
    %v1119 = vld [vmem:[#allocation15 + $0x34] sm:$0xf]
    %v1120 = vld [vmem:[#allocation15 + $0x38] sm:$0xf]
    %v1121 = vld [vmem:[#allocation15 + $0x3c] sm:$0xf]
    %v1122 = vld [vmem:[%s10] sm:$0x1]
    %v1123 = vld [vmem:[#allocation2] sm:$0xf]
    %v1124 = vld [vmem:[#allocation2 + $0x4] sm:$0xf]
    %v1125 = vld [vmem:[#allocation2 + $0x8] sm:$0xf]
    %v1126 = vld [vmem:[#allocation2 + $0xc] sm:$0xf]
    %v1127 = vld [vmem:[#allocation2 + $0x10] sm:$0xf]
    %v1128 = vld [vmem:[#allocation2 + $0x14] sm:$0xf]
    %v1129 = vld [vmem:[#allocation2 + $0x18] sm:$0xf]
    %v1130 = vld [vmem:[#allocation2 + $0x1c] sm:$0xf]
    %v1131 = vld [vmem:[#allocation2 + $0x20] sm:$0xf]
    %v1132 = vld [vmem:[#allocation2 + $0x24] sm:$0xf]
    %v1133 = vld [vmem:[#allocation2 + $0x28] sm:$0xf]
    %v1134 = vld [vmem:[#allocation2 + $0x2c] sm:$0xf]
    %v1135 = vld [vmem:[#allocation2 + $0x30] sm:$0xf]
    %v1136 = vld [vmem:[#allocation2 + $0x34] sm:$0xf]
    %v1137 = vld [vmem:[#allocation2 + $0x38] sm:$0xf]
    %v1138 = vld [vmem:[#allocation2 + $0x3c] sm:$0xf]
    %v1155 = vunpack.c.l.b16 %v1123
    %v1156 = vunpack.c.l.b16 %v1124
    %v1157 = vunpack.c.l.b16 %v1125
    %v1158 = vunpack.c.l.b16 %v1126
    %v1159 = vunpack.c.l.b16 %v1127
    %v1160 = vunpack.c.l.b16 %v1128
    %v1161 = vunpack.c.l.b16 %v1129
    %v1162 = vunpack.c.l.b16 %v1130
    %v1163 = vunpack.c.l.b16 %v1131
    %v1164 = vunpack.c.l.b16 %v1132
    %v1165 = vunpack.c.l.b16 %v1133
    %v1166 = vunpack.c.l.b16 %v1134
    %v1167 = vunpack.c.l.b16 %v1135
    %v1168 = vunpack.c.l.b16 %v1136
    %v1169 = vunpack.c.l.b16 %v1137
    %v1170 = vunpack.c.l.b16 %v1138
    %v1171 = vpack.c.b16 %v1156, %v1155
    %v1172 = vpack.c.b16 %v1158, %v1157
    %v1173 = vpack.c.b16 %v1160, %v1159
    %v1174 = vpack.c.b16 %v1162, %v1161
    %v1175 = vpack.c.b16 %v1164, %v1163
    %v1176 = vpack.c.b16 %v1166, %v1165
    %v1177 = vpack.c.b16 %v1168, %v1167
    %v1178 = vpack.c.b16 %v1170, %v1169
    %1187 = vmatpush.bf16.msra.mxu0 %v1178
    %1188 = vmatpush.bf16.msra.mxu0 %v1177
    %1189 = vmatpush.bf16.msra.mxu0 %v1176
    %1190 = vmatpush.bf16.msra.mxu0 %v1175
    %1191 = vmatpush.bf16.msra.mxu0 %v1174
    %1192 = vmatpush.bf16.msra.mxu0 %v1173
    %1193 = vmatpush.bf16.msra.mxu0 %v1172
    %1194 = vmatpush.bf16.msra.mxu0 %v1171
    %1195 = vmatmul.bf16.gmra.mxu0 %v293
    %v1196 = vpop.f32.mrf.mxu0
    %v1197 = vadd.f32 0.0, %v1196
    %v1198 = vpop.f32.mrf.mxu0
    %v1199 = vadd.f32 0.0, %v1198
    %1200 = vmatmul.bf16.gmra.mxu0 %v294
    %v1201 = vpop.f32.mrf.mxu0
    %v1202 = vadd.f32 0.0, %v1201
    %v1203 = vpop.f32.mrf.mxu0
    %v1204 = vadd.f32 0.0, %v1203
    %1205 = vmatmul.bf16.gmra.mxu0 %v295
    %v1206 = vpop.f32.mrf.mxu0
    %v1207 = vadd.f32 0.0, %v1206
    %v1208 = vpop.f32.mrf.mxu0
    %v1209 = vadd.f32 0.0, %v1208
    %1210 = vmatmul.bf16.gmra.mxu0 %v296
    %v1211 = vpop.f32.mrf.mxu0
    %v1212 = vadd.f32 0.0, %v1211
    %v1213 = vpop.f32.mrf.mxu0
    %v1214 = vadd.f32 0.0, %v1213
    %1215 = vmatmul.bf16.gmra.mxu0 %v297
    %v1216 = vpop.f32.mrf.mxu0
    %v1217 = vadd.f32 0.0, %v1216
    %v1218 = vpop.f32.mrf.mxu0
    %v1219 = vadd.f32 0.0, %v1218
    %1220 = vmatmul.bf16.gmra.mxu0 %v298
    %v1221 = vpop.f32.mrf.mxu0
    %v1222 = vadd.f32 0.0, %v1221
    %v1223 = vpop.f32.mrf.mxu0
    %v1224 = vadd.f32 0.0, %v1223
    %1225 = vmatmul.bf16.gmra.mxu0 %v299
    %v1226 = vpop.f32.mrf.mxu0
    %v1227 = vadd.f32 0.0, %v1226
    %v1228 = vpop.f32.mrf.mxu0
    %v1229 = vadd.f32 0.0, %v1228
    %1230 = vmatmul.bf16.gmra.mxu0 %v300
    %v1231 = vpop.f32.mrf.mxu0
    %v1232 = vadd.f32 0.0, %v1231
    %v1233 = vpop.f32.mrf.mxu0
    %v1234 = vadd.f32 0.0, %v1233
    %1235 = vdwg.mxu0
    %v1236 = vpack.c.bf16 %v1199, %v1197
    %v1237 = vpack.c.bf16 %v1204, %v1202
    %v1238 = vpack.c.bf16 %v1209, %v1207
    %v1239 = vpack.c.bf16 %v1214, %v1212
    %v1240 = vpack.c.bf16 %v1219, %v1217
    %v1241 = vpack.c.bf16 %v1224, %v1222
    %v1242 = vpack.c.bf16 %v1229, %v1227
    %v1243 = vpack.c.bf16 %v1234, %v1232
    %v1260 = vunpack.c.l.b16 %v1106
    %v1261 = vunpack.c.l.b16 %v1107
    %v1262 = vunpack.c.l.b16 %v1108
    %v1263 = vunpack.c.l.b16 %v1109
    %v1264 = vunpack.c.l.b16 %v1110
    %v1265 = vunpack.c.l.b16 %v1111
    %v1266 = vunpack.c.l.b16 %v1112
    %v1267 = vunpack.c.l.b16 %v1113
    %v1268 = vunpack.c.l.b16 %v1114
    %v1269 = vunpack.c.l.b16 %v1115
    %v1270 = vunpack.c.l.b16 %v1116
    %v1271 = vunpack.c.l.b16 %v1117
    %v1272 = vunpack.c.l.b16 %v1118
    %v1273 = vunpack.c.l.b16 %v1119
    %v1274 = vunpack.c.l.b16 %v1120
    %v1275 = vunpack.c.l.b16 %v1121
    %v1276 = vpack.c.b16 %v1261, %v1260
    %v1277 = vpack.c.b16 %v1263, %v1262
    %v1278 = vpack.c.b16 %v1265, %v1264
    %v1279 = vpack.c.b16 %v1267, %v1266
    %v1280 = vpack.c.b16 %v1269, %v1268
    %v1281 = vpack.c.b16 %v1271, %v1270
    %v1282 = vpack.c.b16 %v1273, %v1272
    %v1283 = vpack.c.b16 %v1275, %v1274
    %1292 = vmatpush.bf16.msra.mxu0 %v1283
    %1293 = vmatpush.bf16.msra.mxu0 %v1282
    %1294 = vmatpush.bf16.msra.mxu0 %v1281
    %1295 = vmatpush.bf16.msra.mxu0 %v1280
    %1296 = vmatpush.bf16.msra.mxu0 %v1279
    %1297 = vmatpush.bf16.msra.mxu0 %v1278
    %1298 = vmatpush.bf16.msra.mxu0 %v1277
    %1299 = vmatpush.bf16.msra.mxu0 %v1276
    %1300 = vmatmul.bf16.gmra.mxu0 %v1171
    %v1301 = vpop.f32.mrf.mxu0
    %v1302 = vadd.f32 0.0, %v1301
    %v1303 = vpop.f32.mrf.mxu0
    %v1304 = vadd.f32 0.0, %v1303
    %1305 = vmatmul.bf16.gmra.mxu0 %v1172
    %v1306 = vpop.f32.mrf.mxu0
    %v1307 = vadd.f32 0.0, %v1306
    %v1308 = vpop.f32.mrf.mxu0
    %v1309 = vadd.f32 0.0, %v1308
    %1310 = vmatmul.bf16.gmra.mxu0 %v1173
    %v1311 = vpop.f32.mrf.mxu0
    %v1312 = vadd.f32 0.0, %v1311
    %v1313 = vpop.f32.mrf.mxu0
    %v1314 = vadd.f32 0.0, %v1313
    %1315 = vmatmul.bf16.gmra.mxu0 %v1174
    %v1316 = vpop.f32.mrf.mxu0
    %v1317 = vadd.f32 0.0, %v1316
    %v1318 = vpop.f32.mrf.mxu0
    %v1319 = vadd.f32 0.0, %v1318
    %1320 = vmatmul.bf16.gmra.mxu0 %v1175
    %v1321 = vpop.f32.mrf.mxu0
    %v1322 = vadd.f32 0.0, %v1321
    %v1323 = vpop.f32.mrf.mxu0
    %v1324 = vadd.f32 0.0, %v1323
    %1325 = vmatmul.bf16.gmra.mxu0 %v1176
    %v1326 = vpop.f32.mrf.mxu0
    %v1327 = vadd.f32 0.0, %v1326
    %v1328 = vpop.f32.mrf.mxu0
    %v1329 = vadd.f32 0.0, %v1328
    %1330 = vmatmul.bf16.gmra.mxu0 %v1177
    %v1331 = vpop.f32.mrf.mxu0
    %v1332 = vadd.f32 0.0, %v1331
    %v1333 = vpop.f32.mrf.mxu0
    %v1334 = vadd.f32 0.0, %v1333
    %1335 = vmatmul.bf16.gmra.mxu0 %v1178
    %v1336 = vpop.f32.mrf.mxu0
    %v1337 = vadd.f32 0.0, %v1336
    %v1338 = vpop.f32.mrf.mxu0
    %v1339 = vadd.f32 0.0, %v1338
    %1340 = vdwg.mxu0
    %v1357 = vunpack.c.l.b16 %v1090
    %v1358 = vunpack.c.l.b16 %v1091
    %v1359 = vunpack.c.l.b16 %v1092
    %v1360 = vunpack.c.l.b16 %v1093
    %v1361 = vunpack.c.l.b16 %v1094
    %v1362 = vunpack.c.l.b16 %v1095
    %v1363 = vunpack.c.l.b16 %v1096
    %v1364 = vunpack.c.l.b16 %v1097
    %v1365 = vunpack.c.l.b16 %v1098
    %v1366 = vunpack.c.l.b16 %v1099
    %v1367 = vunpack.c.l.b16 %v1100
    %v1368 = vunpack.c.l.b16 %v1101
    %v1369 = vunpack.c.l.b16 %v1102
    %v1370 = vunpack.c.l.b16 %v1103
    %v1371 = vunpack.c.l.b16 %v1104
    %v1372 = vunpack.c.l.b16 %v1105
    %v1373 = vpack.c.b16 %v1358, %v1357
    %v1374 = vpack.c.b16 %v1360, %v1359
    %v1375 = vpack.c.b16 %v1362, %v1361
    %v1376 = vpack.c.b16 %v1364, %v1363
    %v1377 = vpack.c.b16 %v1366, %v1365
    %v1378 = vpack.c.b16 %v1368, %v1367
    %v1379 = vpack.c.b16 %v1370, %v1369
    %v1380 = vpack.c.b16 %v1372, %v1371
    %1389 = vmatpush.bf16.msra.mxu0 %v1380
    %1390 = vmatpush.bf16.msra.mxu0 %v1379
    %1391 = vmatpush.bf16.msra.mxu0 %v1378
    %1392 = vmatpush.bf16.msra.mxu0 %v1377
    %1393 = vmatpush.bf16.msra.mxu0 %v1376
    %1394 = vmatpush.bf16.msra.mxu0 %v1375
    %1395 = vmatpush.bf16.msra.mxu0 %v1374
    %1396 = vmatpush.bf16.msra.mxu0 %v1373
    %1397 = vmatmul.bf16.gmra.mxu0 %v1236
    %v1398 = vpop.f32.mrf.mxu0
    %v1399 = vadd.f32 %v1302, %v1398
    %v1400 = vpop.f32.mrf.mxu0
    %v1401 = vadd.f32 %v1304, %v1400
    %1402 = vmatmul.bf16.gmra.mxu0 %v1237
    %v1403 = vpop.f32.mrf.mxu0
    %v1404 = vadd.f32 %v1307, %v1403
    %v1405 = vpop.f32.mrf.mxu0
    %v1406 = vadd.f32 %v1309, %v1405
    %1407 = vmatmul.bf16.gmra.mxu0 %v1238
    %v1408 = vpop.f32.mrf.mxu0
    %v1409 = vadd.f32 %v1312, %v1408
    %v1410 = vpop.f32.mrf.mxu0
    %v1411 = vadd.f32 %v1314, %v1410
    %1412 = vmatmul.bf16.gmra.mxu0 %v1239
    %v1413 = vpop.f32.mrf.mxu0
    %v1414 = vadd.f32 %v1317, %v1413
    %v1415 = vpop.f32.mrf.mxu0
    %v1416 = vadd.f32 %v1319, %v1415
    %1417 = vmatmul.bf16.gmra.mxu0 %v1240
    %v1418 = vpop.f32.mrf.mxu0
    %v1419 = vadd.f32 %v1322, %v1418
    %v1420 = vpop.f32.mrf.mxu0
    %v1421 = vadd.f32 %v1324, %v1420
    %1422 = vmatmul.bf16.gmra.mxu0 %v1241
    %v1423 = vpop.f32.mrf.mxu0
    %v1424 = vadd.f32 %v1327, %v1423
    %v1425 = vpop.f32.mrf.mxu0
    %v1426 = vadd.f32 %v1329, %v1425
    %1427 = vmatmul.bf16.gmra.mxu0 %v1242
    %v1428 = vpop.f32.mrf.mxu0
    %v1429 = vadd.f32 %v1332, %v1428
    %v1430 = vpop.f32.mrf.mxu0
    %v1431 = vadd.f32 %v1334, %v1430
    %1432 = vmatmul.bf16.gmra.mxu0 %v1243
    %v1433 = vpop.f32.mrf.mxu0
    %v1434 = vadd.f32 %v1337, %v1433
    %v1435 = vpop.f32.mrf.mxu0
    %v1436 = vadd.f32 %v1339, %v1435
    %1437 = vdwg.mxu0
    %v1439 = vperm.slane %v1122, 0
    %v1441 = vadd.f32 %v1399, %v1439
    %v1442 = vadd.f32 %v1401, %v1439
    %v1443 = vadd.f32 %v1404, %v1439
    %v1444 = vadd.f32 %v1406, %v1439
    %v1445 = vadd.f32 %v1409, %v1439
    %v1446 = vadd.f32 %v1411, %v1439
    %v1447 = vadd.f32 %v1414, %v1439
    %v1448 = vadd.f32 %v1416, %v1439
    %v1449 = vadd.f32 %v1419, %v1439
    %v1450 = vadd.f32 %v1421, %v1439
    %v1451 = vadd.f32 %v1424, %v1439
    %v1452 = vadd.f32 %v1426, %v1439
    %v1453 = vadd.f32 %v1429, %v1439
    %v1454 = vadd.f32 %v1431, %v1439
    %v1455 = vadd.f32 %v1434, %v1439
    %v1456 = vadd.f32 %v1436, %v1439
    %v1457 = vlaneseq
    %v1458 = vand.u32 %v1457, 127
    %vm1459 = vcmp.lt.s32.totalorder %v1458, 8
    %v1460 = vsel %vm1459, %v1441, -1e+30
    %v1461 = vsel %vm1459, %v1442, -1e+30
    %v1462 = vsel %vm1459, %v1443, -1e+30
    %v1463 = vsel %vm1459, %v1444, -1e+30
    %v1464 = vsel %vm1459, %v1445, -1e+30
    %v1465 = vsel %vm1459, %v1446, -1e+30
    %v1466 = vsel %vm1459, %v1447, -1e+30
    %v1467 = vsel %vm1459, %v1448, -1e+30
    %v1468 = vsel %vm1459, %v1449, -1e+30
    %v1469 = vsel %vm1459, %v1450, -1e+30
    %v1470 = vsel %vm1459, %v1451, -1e+30
    %v1471 = vsel %vm1459, %v1452, -1e+30
    %v1472 = vsel %vm1459, %v1453, -1e+30
    %v1473 = vsel %vm1459, %v1454, -1e+30
    %v1474 = vsel %vm1459, %v1455, -1e+30
    %v1475 = vsel %vm1459, %v1456, -1e+30
    %1476 = vmax.xlane.f32.xlu0 %v1460
    %v1477 = vpop.xlane.xlu0 %1476
    %1478 = vmax.xlane.f32.xlu0 %v1461
    %v1479 = vpop.xlane.xlu0 %1478
    %1480 = vmax.xlane.f32.xlu0 %v1462
    %v1481 = vpop.xlane.xlu0 %1480
    %1482 = vmax.xlane.f32.xlu0 %v1463
    %v1483 = vpop.xlane.xlu0 %1482
    %1484 = vmax.xlane.f32.xlu0 %v1464
    %v1485 = vpop.xlane.xlu0 %1484
    %1486 = vmax.xlane.f32.xlu0 %v1465
    %v1487 = vpop.xlane.xlu0 %1486
    %1488 = vmax.xlane.f32.xlu0 %v1466
    %v1489 = vpop.xlane.xlu0 %1488
    %1490 = vmax.xlane.f32.xlu0 %v1467
    %v1491 = vpop.xlane.xlu0 %1490
    %1492 = vmax.xlane.f32.xlu0 %v1468
    %v1493 = vpop.xlane.xlu0 %1492
    %1494 = vmax.xlane.f32.xlu0 %v1469
    %v1495 = vpop.xlane.xlu0 %1494
    %1496 = vmax.xlane.f32.xlu0 %v1470
    %v1497 = vpop.xlane.xlu0 %1496
    %1498 = vmax.xlane.f32.xlu0 %v1471
    %v1499 = vpop.xlane.xlu0 %1498
    %1500 = vmax.xlane.f32.xlu0 %v1472
    %v1501 = vpop.xlane.xlu0 %1500
    %1502 = vmax.xlane.f32.xlu0 %v1473
    %v1503 = vpop.xlane.xlu0 %1502
    %1504 = vmax.xlane.f32.xlu0 %v1474
    %v1505 = vpop.xlane.xlu0 %1504
    %1506 = vmax.xlane.f32.xlu0 %v1475
    %v1507 = vpop.xlane.xlu0 %1506
    %v1508 = vsub.f32 %v1460, %v1477
    %v1509 = vsub.f32 %v1461, %v1479
    %v1510 = vsub.f32 %v1462, %v1481
    %v1511 = vsub.f32 %v1463, %v1483
    %v1512 = vsub.f32 %v1464, %v1485
    %v1513 = vsub.f32 %v1465, %v1487
    %v1514 = vsub.f32 %v1466, %v1489
    %v1515 = vsub.f32 %v1467, %v1491
    %v1516 = vsub.f32 %v1468, %v1493
    %v1517 = vsub.f32 %v1469, %v1495
    %v1518 = vsub.f32 %v1470, %v1497
    %v1519 = vsub.f32 %v1471, %v1499
    %v1520 = vsub.f32 %v1472, %v1501
    %v1521 = vsub.f32 %v1473, %v1503
    %v1522 = vsub.f32 %v1474, %v1505
    %v1523 = vsub.f32 %v1475, %v1507
    %v1524 = vmul.f32 %v1508, 1.442695
    %v1525 = vpow.pop %v1524
    %v1526 = vmul.f32 %v1509, 1.442695
    %v1527 = vpow.pop %v1526
    %v1528 = vmul.f32 %v1510, 1.442695
    %v1529 = vpow.pop %v1528
    %v1530 = vmul.f32 %v1511, 1.442695
    %v1531 = vpow.pop %v1530
    %v1532 = vmul.f32 %v1512, 1.442695
    %v1533 = vpow.pop %v1532
    %v1534 = vmul.f32 %v1513, 1.442695
    %v1535 = vpow.pop %v1534
    %v1536 = vmul.f32 %v1514, 1.442695
    %v1537 = vpow.pop %v1536
    %v1538 = vmul.f32 %v1515, 1.442695
    %v1539 = vpow.pop %v1538
    %v1540 = vmul.f32 %v1516, 1.442695
    %v1541 = vpow.pop %v1540
    %v1542 = vmul.f32 %v1517, 1.442695
    %v1543 = vpow.pop %v1542
    %v1544 = vmul.f32 %v1518, 1.442695
    %v1545 = vpow.pop %v1544
    %v1546 = vmul.f32 %v1519, 1.442695
    %v1547 = vpow.pop %v1546
    %v1548 = vmul.f32 %v1520, 1.442695
    %v1549 = vpow.pop %v1548
    %v1550 = vmul.f32 %v1521, 1.442695
    %v1551 = vpow.pop %v1550
    %v1552 = vmul.f32 %v1522, 1.442695
    %v1553 = vpow.pop %v1552
    %v1554 = vmul.f32 %v1523, 1.442695
    %v1555 = vpow.pop %v1554
    %1556 = vadd.xlane.f32.xlu0 %v1525
    %v1557 = vpop.xlane.xlu0 %1556
    %1558 = vadd.xlane.f32.xlu0 %v1527
    %v1559 = vpop.xlane.xlu0 %1558
    %1560 = vadd.xlane.f32.xlu0 %v1529
    %v1561 = vpop.xlane.xlu0 %1560
    %1562 = vadd.xlane.f32.xlu0 %v1531
    %v1563 = vpop.xlane.xlu0 %1562
    %1564 = vadd.xlane.f32.xlu0 %v1533
    %v1565 = vpop.xlane.xlu0 %1564
    %1566 = vadd.xlane.f32.xlu0 %v1535
    %v1567 = vpop.xlane.xlu0 %1566
    %1568 = vadd.xlane.f32.xlu0 %v1537
    %v1569 = vpop.xlane.xlu0 %1568
    %1570 = vadd.xlane.f32.xlu0 %v1539
    %v1571 = vpop.xlane.xlu0 %1570
    %1572 = vadd.xlane.f32.xlu0 %v1541
    %v1573 = vpop.xlane.xlu0 %1572
    %1574 = vadd.xlane.f32.xlu0 %v1543
    %v1575 = vpop.xlane.xlu0 %1574
    %1576 = vadd.xlane.f32.xlu0 %v1545
    %v1577 = vpop.xlane.xlu0 %1576
    %1578 = vadd.xlane.f32.xlu0 %v1547
    %v1579 = vpop.xlane.xlu0 %1578
    %1580 = vadd.xlane.f32.xlu0 %v1549
    %v1581 = vpop.xlane.xlu0 %1580
    %1582 = vadd.xlane.f32.xlu0 %v1551
    %v1583 = vpop.xlane.xlu0 %1582
    %1584 = vadd.xlane.f32.xlu0 %v1553
    %v1585 = vpop.xlane.xlu0 %1584
    %1586 = vadd.xlane.f32.xlu0 %v1555
    %v1587 = vpop.xlane.xlu0 %1586
    %v1588 = vlog2.pop %v1557
    %v1589 = vmul.f32 %v1588, 0.6931472
    %v1590 = vlog2.pop %v1559
    %v1591 = vmul.f32 %v1590, 0.6931472
    %v1592 = vlog2.pop %v1561
    %v1593 = vmul.f32 %v1592, 0.6931472
    %v1594 = vlog2.pop %v1563
    %v1595 = vmul.f32 %v1594, 0.6931472
    %v1596 = vlog2.pop %v1565
    %v1597 = vmul.f32 %v1596, 0.6931472
    %v1598 = vlog2.pop %v1567
    %v1599 = vmul.f32 %v1598, 0.6931472
    %v1600 = vlog2.pop %v1569
    %v1601 = vmul.f32 %v1600, 0.6931472
    %v1602 = vlog2.pop %v1571
    %v1603 = vmul.f32 %v1602, 0.6931472
    %v1604 = vlog2.pop %v1573
    %v1605 = vmul.f32 %v1604, 0.6931472
    %v1606 = vlog2.pop %v1575
    %v1607 = vmul.f32 %v1606, 0.6931472
    %v1608 = vlog2.pop %v1577
    %v1609 = vmul.f32 %v1608, 0.6931472
    %v1610 = vlog2.pop %v1579
    %v1611 = vmul.f32 %v1610, 0.6931472
    %v1612 = vlog2.pop %v1581
    %v1613 = vmul.f32 %v1612, 0.6931472
    %v1614 = vlog2.pop %v1583
    %v1615 = vmul.f32 %v1614, 0.6931472
    %v1616 = vlog2.pop %v1585
    %v1617 = vmul.f32 %v1616, 0.6931472
    %v1618 = vlog2.pop %v1587
    %v1619 = vmul.f32 %v1618, 0.6931472
    %v1620 = vsub.f32 %v1508, %v1589
    %v1621 = vsub.f32 %v1509, %v1591
    %v1622 = vsub.f32 %v1510, %v1593
    %v1623 = vsub.f32 %v1511, %v1595
    %v1624 = vsub.f32 %v1512, %v1597
    %v1625 = vsub.f32 %v1513, %v1599
    %v1626 = vsub.f32 %v1514, %v1601
    %v1627 = vsub.f32 %v1515, %v1603
    %v1628 = vsub.f32 %v1516, %v1605
    %v1629 = vsub.f32 %v1517, %v1607
    %v1630 = vsub.f32 %v1518, %v1609
    %v1631 = vsub.f32 %v1519, %v1611
    %v1632 = vsub.f32 %v1520, %v1613
    %v1633 = vsub.f32 %v1521, %v1615
    %v1634 = vsub.f32 %v1522, %v1617
    %v1635 = vsub.f32 %v1523, %v1619
    %1636 = vst [vmem:[#allocation17] sm:$0xff] %v1620
    %1637 = vst [vmem:[#allocation17 + $0x8] sm:$0xff] %v1621
    %1638 = vst [vmem:[#allocation17 + $0x10] sm:$0xff] %v1622
    %1639 = vst [vmem:[#allocation17 + $0x18] sm:$0xff] %v1623
    %1640 = vst [vmem:[#allocation17 + $0x20] sm:$0xff] %v1624
    %1641 = vst [vmem:[#allocation17 + $0x28] sm:$0xff] %v1625
    %1642 = vst [vmem:[#allocation17 + $0x30] sm:$0xff] %v1626
    %1643 = vst [vmem:[#allocation17 + $0x38] sm:$0xff] %v1627
    %1644 = vst [vmem:[#allocation17 + $0x40] sm:$0xff] %v1628
    %1645 = vst [vmem:[#allocation17 + $0x48] sm:$0xff] %v1629
    %1646 = vst [vmem:[#allocation17 + $0x50] sm:$0xff] %v1630
    %1647 = vst [vmem:[#allocation17 + $0x58] sm:$0xff] %v1631
    %1648 = vst [vmem:[#allocation17 + $0x60] sm:$0xff] %v1632
    %1649 = vst [vmem:[#allocation17 + $0x68] sm:$0xff] %v1633
    %1650 = vst [vmem:[#allocation17 + $0x70] sm:$0xff] %v1634
    %1651 = vst [vmem:[#allocation17 + $0x78] sm:$0xff] %v1635
    // Predicated region
    $region78: #{tpu_custom_call.1} parent=1 // pred_check
      _
    $region79: #{tpu_custom_call.1} parent=1 // pred_check_branch
      %1653 = sbr.rel (0) target = $region81
    $region80: #{tpu_custom_call.1} parent=1 // pred_region
      %1655 = vsyncadd [#allocation5], 0
      %s1656 = sshll.u32 [#allocation17], 4
      %s1657 = int_to_ptr.vmem [resolvable:$true] %s1656
      %s1658 = sshll.u32 %s11, 4
      %s1659 = int_to_ptr.hbm [resolvable:$true] %s1658
      %1664 = dma.vmem_to_hbm [thread:$0]  %s1657, 2048, %s1659, [#allocation5], 128, 128, 8
    $region81: #{tpu_custom_call.1} parent=1 // pred_fallthru
      _
    // Predicated region
    $region82: #{tpu_custom_call.1} parent=1 // pred_check
      _
    $region83: #{tpu_custom_call.1} parent=1 // pred_check_branch
      %1666 = sbr.rel (0) target = $region85
    $region84: #{tpu_custom_call.1} parent=1 // pred_region
      %1668 = dma.done [#allocation5], 2048
    $region85: #{tpu_custom_call.1} parent=1 // pred_fallthru
      _
    %1669 = vsyncpa [#allocation4], 1
    %1670 = vsyncpa [#allocation7], 1
    %1671 = vsyncpa [#allocation10], 1
    %1672 = vsyncpa [#allocation13], 1
    %1673 = vsyncpa [#allocation16], 1
    %1674 = vsyncpa [#allocation5], 1

</llo_original>
